<compile_context>
chip_gen: v6e
topology: v6e:2x2x1
jax: 0.10.0
libtpu: 0.0.40
codegen_flags: <defaults>
</compile_context>

<pallas_src>
import jax
import jax.numpy as jnp
from jax import lax
from jax.experimental import pallas as pl
from jax.experimental.pallas import tpu as pltpu

IMG_DIM = 784
IN_DIM = IMG_DIM + 1     # 785
HID = 200
OUT = 1
HID_PAD = 256            # 2 * 128 lane-aligned hidden dim

LN_EPS = 1e-5
LEAKY_SLOPE = 0.02


def _choose_tb(b):
    """Batch-tile rows per grid step (sublane-aligned; >=2 grid steps once B >= 256)."""
    bp8 = -(-b // 8) * 8
    if bp8 <= 128:
        return bp8                 # tiny batches: one small tile, minimal MXU waste
    bp128 = -(-b // 128) * 128
    if bp128 >= 2048:
        return 1024
    if bp128 >= 1024:
        return 512
    if bp128 >= 512:
        return 256
    return 128                     # keeps the grid at >= 2 steps for megacore


def _disc_kernel(img_ref, lab_ref, w1_ref, vec_ref, o_ref):
    # img_ref: (TB, 784) f32   lab_ref: (TB, 1) f32
    # w1_ref : (784, HID_PAD) bf16, VMEM-resident (padded cols >= 200 are zero)
    # vec_ref: (4, HID_PAD) f32, VMEM-resident:
    #          row 0 = b1, row 1 = w1 label row, row 2 = gamma*w2, row 3 lane 0 = bias'
    x = img_ref[...].astype(jnp.bfloat16)          # cast in VMEM -> native bf16 MXU
    h = jnp.dot(x, w1_ref[...], preferred_element_type=jnp.float32)   # (TB, HID_PAD)

    vec = vec_ref[...]
    b1 = vec[0:1, :]
    w1_lab = vec[1:2, :]
    w2g = vec[2:3, :]                              # gamma * w2 (padded lanes zero)
    bias2 = vec[3:4, 0:1]                          # (1, 1): <beta, w2> + b2

    # Rank-1 label update (VPU) + bias, then LeakyReLU(0.02).
    # Padded lanes of h stay exactly 0 (zero w1 cols / w1_lab / b1 there).
    h = h + lab_ref[...] * w1_lab + b1
    h = jnp.where(h >= 0, h, LEAKY_SLOPE * h)

    # LayerNorm statistics over exactly the HID=200 real lanes (biased var, PyTorch).
    lane = lax.broadcasted_iota(jnp.int32, (1, HID_PAD), 1)
    real = (lane < HID).astype(jnp.float32)
    inv_n = jnp.float32(1.0 / HID)
    mean = jnp.sum(h, axis=-1, keepdims=True) * inv_n    # padded lanes contribute 0
    centered = (h - mean) * real
    var = jnp.sum(centered * centered, axis=-1, keepdims=True) * inv_n

    # Second linear with the LN affine folded in:
    #   logit = rsqrt(var+eps) * <centered, gamma*w2> + (<beta, w2> + b2)
    red = jnp.sum(centered * w2g, axis=-1, keepdims=True)      # (TB, 1)
    logit = lax.rsqrt(var + LN_EPS) * red + bias2

    # Sigmoid: exp + approximate reciprocal, both on the EUP slot.
    o_ref[...] = pl.reciprocal(1.0 + jnp.exp(-logit), approx=True)


def init_params(key):
    """PyTorch-default-style init, natural (unpadded) shapes."""
    k1, k2, k3, k4 = jax.random.split(key, 4)
    bnd1 = 1.0 / jnp.sqrt(jnp.float32(IN_DIM))
    bnd2 = 1.0 / jnp.sqrt(jnp.float32(HID))
    w1 = jax.random.uniform(k1, (IN_DIM, HID), jnp.float32, -bnd1, bnd1)
    b1 = jax.random.uniform(k2, (HID,), jnp.float32, -bnd1, bnd1)
    gamma = jnp.ones((HID,), jnp.float32)    # LayerNorm weight
    beta = jnp.zeros((HID,), jnp.float32)    # LayerNorm bias
    w2 = jax.random.uniform(k3, (HID, OUT), jnp.float32, -bnd2, bnd2)
    b2 = jax.random.uniform(k4, (OUT,), jnp.float32, -bnd2, bnd2)
    return (w1, b1, gamma, beta, w2, b2)


def pack_params(params):
    """One-time packing into the kernel layout.

    Returns:
      w1_img: (784, HID_PAD) bf16  (image rows of w1, zero-padded columns)
      vecs  : (4, HID_PAD)  f32    rows = [b1, w1_label_row, gamma*w2, bias'@lane0]
    """
    w1, b1, gamma, beta, w2, b2 = params
    w1_img = jnp.zeros((IMG_DIM, HID_PAD), jnp.float32).at[:, :HID].set(w1[:IMG_DIM, :])
    w1_img = w1_img.astype(jnp.bfloat16)
    w2v = w2.reshape(HID)
    vecs = jnp.zeros((4, HID_PAD), jnp.float32)
    vecs = vecs.at[0, :HID].set(b1)
    vecs = vecs.at[1, :HID].set(w1[IMG_DIM, :])            # label weight row
    vecs = vecs.at[2, :HID].set(gamma * w2v)               # folded LN scale
    vecs = vecs.at[3, 0].set(jnp.dot(beta, w2v) + b2[0])   # folded LN shift + b2
    return (w1_img, vecs)


@jax.jit
def discriminator_forward_batched(images, labels, packed_params):
    """images: (B, 784), labels: (B, 1) or (B,) -> (B, 1) f32 probabilities."""
    w1_img, vecs = packed_params
    images = images.astype(jnp.float32)
    labels = labels.astype(jnp.float32).reshape(-1, 1)

    B = images.shape[0]
    TB = _choose_tb(B)
    Bp = pl.cdiv(B, TB) * TB
    if Bp != B:
        images = jnp.pad(images, ((0, Bp - B), (0, 0)))
        labels = jnp.pad(labels, ((0, Bp - B), (0, 0)))

    grid = (Bp // TB,)
    cost = pl.CostEstimate(
        flops=2 * Bp * IMG_DIM * HID_PAD + 12 * Bp * HID_PAD,
        transcendentals=2 * Bp,
        bytes_accessed=(4 * Bp * IMG_DIM + 4 * Bp            # images + labels
                        + 2 * IMG_DIM * HID_PAD              # bf16 w1 (resident)
                        + 4 * 4 * HID_PAD + 4 * Bp),         # vecs + output
    )

    out = pl.pallas_call(
        _disc_kernel,
        out_shape=jax.ShapeDtypeStruct((Bp, OUT), jnp.float32),
        grid=grid,
        in_specs=[
            pl.BlockSpec((TB, IMG_DIM), lambda i: (i, 0)),        # image tile per step
            pl.BlockSpec((TB, 1), lambda i: (i, 0)),              # label tile per step
            pl.BlockSpec((IMG_DIM, HID_PAD), lambda i: (0, 0)),   # w1 (VMEM-resident)
            pl.BlockSpec((4, HID_PAD), lambda i: (0, 0)),         # merged small vectors
        ],
        out_specs=pl.BlockSpec((TB, OUT), lambda i: (i, 0)),
        compiler_params=pltpu.CompilerParams(
            dimension_semantics=("parallel",)),
        cost_estimate=cost,
    )(images, labels, w1_img, vecs)
    return out[:B]


def discriminator_forward(image_vec, label_vec, packed_params):
    """Single-sample API matching the PyTorch forward: (784,), (1,) -> (1,).

    Routes through the same kernel, but _choose_tb picks a tiny 8-row tile so a
    lone sample does not pay for a full 128-row MXU tile.
    """
    out = discriminator_forward_batched(
        image_vec.reshape(1, IMG_DIM), jnp.reshape(label_vec, (1, 1)), packed_params)
    return out.reshape(OUT)


def reference_forward_batched(images, labels, params):
    """Pure-JAX f32 reference (unpadded math) for correctness checking."""
    w1, b1, gamma, beta, w2, b2 = params
    x = jnp.concatenate([images, labels], axis=-1)        # (B, 785)
    h = x @ w1 + b1
    h = jnp.where(h >= 0, h, LEAKY_SLOPE * h)
    mean = jnp.mean(h, axis=-1, keepdims=True)
    var = jnp.mean((h - mean) ** 2, axis=-1, keepdims=True)
    h = (h - mean) / jnp.sqrt(var + LN_EPS) * gamma + beta
    return jax.nn.sigmoid(h @ w2 + b2)                     # (B, 1)


if __name__ == "__main__":
    key = jax.random.PRNGKey(0)
    kp, ki, kl = jax.random.split(key, 3)

    params = init_params(kp)
    packed = pack_params(params)

    B = 256                                                # 2 batch tiles of 128
    images = jax.random.uniform(ki, (B, IMG_DIM), jnp.float32)
    labels = jax.random.uniform(kl, (B, 1), jnp.float32)

    out = jax.block_until_ready(discriminator_forward_batched(images, labels, packed))
    ref = reference_forward_batched(images, labels, params)
    assert out.shape == (B, OUT), out.shape
    max_err = float(jnp.max(jnp.abs(out - ref)))
    assert max_err < 2e-2, max_err        # bf16 x/w1 path vs f32 reference

    # Single-sample path, matching the PyTorch forward signature/shape.
    out1 = jax.block_until_ready(discriminator_forward(images[0], labels[0], packed))
    assert out1.shape == (OUT,), out1.shape
    assert float(jnp.max(jnp.abs(out1 - ref[0]))) < 2e-2, (out1, ref[0])

    print("KERNEL_OK")
</pallas_src>

<mosaic_0001>
module attributes {stable_mosaic.version = 11 : i64} {
  func.func @_disc_kernel(%arg0: i32, %arg1: memref<128x784xf32, #tpu.memory_space<vmem>>, %arg2: memref<128x1xf32, #tpu.memory_space<vmem>>, %arg3: memref<784x256xbf16, #tpu.memory_space<vmem>>, %arg4: memref<4x256xf32, #tpu.memory_space<vmem>>, %arg5: memref<128x1xf32, #tpu.memory_space<vmem>>) attributes {dimension_semantics = [#tpu.dimension_semantics<parallel>], iteration_bounds = array<i64: 2>, scalar_prefetch = 0 : i64, scratch_operands = 0 : i64, tpu.core_type = #tpu.core_type<tc>, window_params = [{transform_indices = @transform_0, window_bounds = array<i64: 128, 784>}, {transform_indices = @transform_1, window_bounds = array<i64: 128, 1>}, {pipeline_mode = #tpu.pipeline_mode<synchronous>, transform_indices = @transform_2, window_bounds = array<i64: 784, 256>}, {pipeline_mode = #tpu.pipeline_mode<synchronous>, transform_indices = @transform_3, window_bounds = array<i64: 4, 256>}, {transform_indices = @transform_4, window_bounds = array<i64: 128, 1>}]} {
    %c0 = arith.constant 0 : index
    %c0_0 = arith.constant 0 : index
    %0 = vector.load %arg1[%c0, %c0_0] : memref<128x784xf32, #tpu.memory_space<vmem>>, vector<128x784xf32>
    %1 = arith.truncf %0 : vector<128x784xf32> to vector<128x784xbf16>
    %c0_1 = arith.constant 0 : index
    %c0_2 = arith.constant 0 : index
    %2 = vector.load %arg3[%c0_1, %c0_2] : memref<784x256xbf16, #tpu.memory_space<vmem>>, vector<784x256xbf16>
    %cst = arith.constant dense<0.000000e+00> : vector<128x256xf32>
    %3 = tpu.matmul %1, %2, %cst {dimension_numbers = #tpu.dot_dimension_numbers<[1], [0], [0], [1], [0, 0, 1, 1], [], []>} : vector<128x784xbf16>, vector<784x256xbf16>, vector<128x256xf32> -> vector<128x256xf32>
    %c0_3 = arith.constant 0 : index
    %c0_4 = arith.constant 0 : index
    %4 = vector.load %arg4[%c0_3, %c0_4] : memref<4x256xf32, #tpu.memory_space<vmem>>, vector<4x256xf32>
    %5 = vector.extract_strided_slice %4 {offsets = [0, 0], sizes = [1, 256], strides = [1, 1]} : vector<4x256xf32> to vector<1x256xf32>
    %6 = vector.extract_strided_slice %4 {offsets = [1, 0], sizes = [1, 256], strides = [1, 1]} : vector<4x256xf32> to vector<1x256xf32>
    %7 = vector.extract_strided_slice %4 {offsets = [2, 0], sizes = [1, 256], strides = [1, 1]} : vector<4x256xf32> to vector<1x256xf32>
    %8 = vector.extract_strided_slice %4 {offsets = [3, 0], sizes = [1, 1], strides = [1, 1]} : vector<4x256xf32> to vector<1x1xf32>
    %c0_5 = arith.constant 0 : index
    %c0_6 = arith.constant 0 : index
    %9 = vector.load %arg2[%c0_5, %c0_6] : memref<128x1xf32, #tpu.memory_space<vmem>>, vector<128x1xf32>
    %10 = vector.broadcast %9 : vector<128x1xf32> to vector<128x256xf32>
    %11 = vector.broadcast %6 : vector<1x256xf32> to vector<128x256xf32>
    %12 = arith.mulf %10, %11 : vector<128x256xf32>
    %13 = arith.addf %3, %12 : vector<128x256xf32>
    %14 = vector.broadcast %5 : vector<1x256xf32> to vector<128x256xf32>
    %15 = arith.addf %13, %14 : vector<128x256xf32>
    %cst_7 = arith.constant 0.000000e+00 : f32
    %16 = vector.broadcast %cst_7 : f32 to vector<128x256xf32>
    %17 = arith.cmpf oge, %15, %16 : vector<128x256xf32>
    %cst_8 = arith.constant 2.000000e-02 : f32
    %18 = vector.broadcast %cst_8 : f32 to vector<128x256xf32>
    %19 = arith.mulf %18, %15 : vector<128x256xf32>
    %20 = arith.select %17, %15, %19 : vector<128x256xi1>, vector<128x256xf32>
    %21 = tpu.iota {dimensions = array<i32: 1>} : vector<1x256xi32>
    %c200_i32 = arith.constant 200 : i32
    %22 = vector.broadcast %c200_i32 : i32 to vector<1x256xi32>
    %23 = arith.cmpi slt, %21, %22 : vector<1x256xi32>
    %24 = arith.extui %23 : vector<1x256xi1> to vector<1x256xi32>
    %25 = arith.sitofp %24 : vector<1x256xi32> to vector<1x256xf32>
    %cst_9 = arith.constant dense<0.000000e+00> : vector<128xf32>
    %26 = vector.multi_reduction <add>, %20, %cst_9 [1] : vector<128x256xf32> to vector<128xf32>
    %27 = vector.shape_cast %26 : vector<128xf32> to vector<128x1xf32>
    %cst_10 = arith.constant 5.000000e-03 : f32
    %28 = vector.broadcast %cst_10 : f32 to vector<128x1xf32>
    %29 = arith.mulf %27, %28 : vector<128x1xf32>
    %30 = vector.broadcast %29 : vector<128x1xf32> to vector<128x256xf32>
    %31 = arith.subf %20, %30 : vector<128x256xf32>
    %32 = vector.broadcast %25 : vector<1x256xf32> to vector<128x256xf32>
    %33 = arith.mulf %31, %32 : vector<128x256xf32>
    %34 = arith.mulf %33, %33 : vector<128x256xf32>
    %cst_11 = arith.constant dense<0.000000e+00> : vector<128xf32>
    %35 = vector.multi_reduction <add>, %34, %cst_11 [1] : vector<128x256xf32> to vector<128xf32>
    %36 = vector.shape_cast %35 : vector<128xf32> to vector<128x1xf32>
    %cst_12 = arith.constant 5.000000e-03 : f32
    %37 = vector.broadcast %cst_12 : f32 to vector<128x1xf32>
    %38 = arith.mulf %36, %37 : vector<128x1xf32>
    %39 = vector.broadcast %7 : vector<1x256xf32> to vector<128x256xf32>
    %40 = arith.mulf %33, %39 : vector<128x256xf32>
    %cst_13 = arith.constant dense<0.000000e+00> : vector<128xf32>
    %41 = vector.multi_reduction <add>, %40, %cst_13 [1] : vector<128x256xf32> to vector<128xf32>
    %42 = vector.shape_cast %41 : vector<128xf32> to vector<128x1xf32>
    %cst_14 = arith.constant 9.99999974E-6 : f32
    %43 = vector.broadcast %cst_14 : f32 to vector<128x1xf32>
    %44 = arith.addf %38, %43 : vector<128x1xf32>
    %45 = math.rsqrt %44 : vector<128x1xf32>
    %46 = arith.mulf %45, %42 : vector<128x1xf32>
    %47 = vector.broadcast %8 : vector<1x1xf32> to vector<128x1xf32>
    %48 = arith.addf %46, %47 : vector<128x1xf32>
    %cst_15 = arith.constant 0.000000e+00 : f32
    %49 = vector.broadcast %cst_15 : f32 to vector<128x1xf32>
    %50 = arith.subf %49, %48 : vector<128x1xf32>
    %51 = math.exp %50 : vector<128x1xf32>
    %cst_16 = arith.constant 1.000000e+00 : f32
    %52 = vector.broadcast %cst_16 : f32 to vector<128x1xf32>
    %53 = arith.addf %52, %51 : vector<128x1xf32>
    %54 = tpu.reciprocal %53 {approx = true} : vector<128x1xf32> -> vector<128x1xf32>
    %c0_17 = arith.constant 0 : index
    %c0_18 = arith.constant 0 : index
    %55 = vector.load %arg5[%c0_17, %c0_18] : memref<128x1xf32, #tpu.memory_space<vmem>>, vector<128x1xf32>
    tpu.vector_store %arg5[%c0_17, %c0_18], %54 {strides = array<i32>} : memref<128x1xf32, #tpu.memory_space<vmem>>, vector<128x1xf32>,
    return
  }
  func.func @transform_0(%arg0: i32) -> (i32, i32) {
    %c0_i32 = arith.constant 0 : i32
    %c0_i32_0 = arith.constant 0 : i32
    return %arg0, %c0_i32 : i32, i32
  }
  func.func @transform_1(%arg0: i32) -> (i32, i32) {
    %c0_i32 = arith.constant 0 : i32
    %c0_i32_0 = arith.constant 0 : i32
    return %arg0, %c0_i32 : i32, i32
  }
  func.func @transform_2(%arg0: i32) -> (i32, i32) {
    %c0_i32 = arith.constant 0 : i32
    %c0_i32_0 = arith.constant 0 : i32
    %c0_i32_1 = arith.constant 0 : i32
    return %c0_i32, %c0_i32_0 : i32, i32
  }
  func.func @transform_3(%arg0: i32) -> (i32, i32) {
    %c0_i32 = arith.constant 0 : i32
    %c0_i32_0 = arith.constant 0 : i32
    %c0_i32_1 = arith.constant 0 : i32
    return %c0_i32, %c0_i32_0 : i32, i32
  }
  func.func @transform_4(%arg0: i32) -> (i32, i32) {
    %c0_i32 = arith.constant 0 : i32
    %c0_i32_0 = arith.constant 0 : i32
    return %arg0, %c0_i32 : i32, i32
  }
}

</mosaic_0001>

<llo_original>
// kernel: discriminator_forward_batched.1
$region0: #{discriminator_forward_batched.1}
  #allocation0 [shape = 'u32[]', space=smem, size = 0x4, offset = 0x4, fixed_abs, tag = 'smem constant byte address 0x4 - core index']
  #allocation1 [shape = 'u32[144,128]{1,0:T(1,128)}', space=vmem, size = 0x12000, scoped, tag = 'internal scratch']
  %s0 = inlined_call_operand.vmem [shape: f32[256,784], index: 0, kind: input, shape index: {}]
  %s1 = inlined_call_operand.vmem [shape: f32[256,1], index: 1, kind: input, shape index: {}]
  %s2 = inlined_call_operand.vmem [shape: bf16[784,256], index: 2, kind: input, shape index: {}]
  %s3 = inlined_call_operand.vmem [shape: f32[4,256], index: 3, kind: input, shape index: {}]
  %s4 = inlined_call_operand.vmem [shape: f32[256,1], index: 4, kind: output, shape index: {}]
  %s5 = sld [smem:[#allocation0]]
  $region49: #{discriminator_forward_batched.1} parent=0
    _
  %s7 = ssub.s32 1, %s5
  %s8 = scalar_select 0, %s7, %s5
  loop: start=0, step=1, limit=4
  $region2: #{discriminator_forward_batched.1} parent=0 // loop_pre_header
    _
  $region3: #{discriminator_forward_batched.1} parent=0 // loop_header
    %s10 = sphi 0, %s14
    %p11 = scmp.ge.s32.totalorder %s10, 4
    %s20 = sphi 0, %s22
    %s23 = sphi 0, %s20
    %s24 = sphi 0, %s23
    %s40 = sphi 0, %s24
    %s46 = sphi 0, %s48
    %s49 = sphi 0, %s46
    %s50 = sphi 0, %s49
    %s66 = sphi 0, %s50
    %s70 = sphi 0, %s70
    %s72 = sphi 0, %s70
    %s73 = sphi 0, %s72
    %s87 = sphi 0, %s73
    %s91 = sphi 0, %s91
    %s93 = sphi 0, %s91
    %s94 = sphi 0, %s93
    %s108 = sphi 0, %s94
    %s114 = sphi 0, %s116
    %s117 = sphi 0, %s114
    %s118 = sphi 0, %s117
    %s134 = sphi 0, %s118
  $region4: #{discriminator_forward_batched.1} parent=0 // loop_header_branch
    %13 = sbr.rel (%p11) target = $region8
  $region5: #{discriminator_forward_batched.1} parent=0 // loop_body
    %s15 = ssub.s32 %s10, 1
    %s16 = ssub.s32 %s10, 2
    %s17 = sadd.s32 %s10, 1
    %s18 = ssub.s32 %s10, %s17
    %p19 = scmp.eq.s32.totalorder %s18, 0
    %s21 = sadd.s32 %s20, 1
    %s22 = scalar_select %p19, %s20, %s21
    %p25 = pneg %p19
    %p26 = scmp.eq.s32.totalorder %s10, 1
    %p27 = por %p25, %p26
    %p28 = scmp.ne.s32.totalorder %s20, %s23
    %p29 = scmp.eq.s32.totalorder %s10, 0
    %p30 = por %p28, %p29
    %p31 = scmp.ne.s32.totalorder %s20, %s23
    %p32 = scmp.eq.s32.totalorder %s15, 1
    %p33 = por %p31, %p32
    %p34 = scmp.ne.s32.totalorder %s23, %s24
    %p35 = scmp.eq.s32.totalorder %s15, 0
    %p36 = por %p34, %p35
    %p37 = scmp.ne.s32.totalorder %s23, %s24
    %p38 = scmp.eq.s32.totalorder %s16, 1
    %p39 = por %p37, %p38
    %p41 = scmp.ne.s32.totalorder %s24, %s40
    %p42 = scmp.eq.s32.totalorder %s16, 0
    %p43 = por %p41, %p42
    %s44 = ssub.s32 %s10, %s17
    %p45 = scmp.eq.s32.totalorder %s44, 0
    %s47 = sadd.s32 %s46, 1
    %s48 = scalar_select %p45, %s46, %s47
    %p51 = pneg %p45
    %p52 = scmp.eq.s32.totalorder %s10, 1
    %p53 = por %p51, %p52
    %p54 = scmp.ne.s32.totalorder %s46, %s49
    %p55 = scmp.eq.s32.totalorder %s10, 0
    %p56 = por %p54, %p55
    %p57 = scmp.ne.s32.totalorder %s46, %s49
    %p58 = scmp.eq.s32.totalorder %s15, 1
    %p59 = por %p57, %p58
    %p60 = scmp.ne.s32.totalorder %s49, %s50
    %p61 = scmp.eq.s32.totalorder %s15, 0
    %p62 = por %p60, %p61
    %p63 = scmp.ne.s32.totalorder %s49, %s50
    %p64 = scmp.eq.s32.totalorder %s16, 1
    %p65 = por %p63, %p64
    %p67 = scmp.ne.s32.totalorder %s50, %s66
    %p68 = scmp.eq.s32.totalorder %s16, 0
    %p69 = por %p67, %p68
    %s71 = sadd.s32 %s70, 1
    %p74 = scmp.eq.s32.totalorder %s10, 1
    %p75 = scmp.ne.s32.totalorder %s70, %s72
    %p76 = scmp.eq.s32.totalorder %s10, 0
    %p77 = por %p75, %p76
    %p78 = scmp.ne.s32.totalorder %s70, %s72
    %p79 = scmp.eq.s32.totalorder %s15, 1
    %p80 = por %p78, %p79
    %p81 = scmp.ne.s32.totalorder %s72, %s73
    %p82 = scmp.eq.s32.totalorder %s15, 0
    %p83 = por %p81, %p82
    %p84 = scmp.ne.s32.totalorder %s72, %s73
    %p85 = scmp.eq.s32.totalorder %s16, 1
    %p86 = por %p84, %p85
    %p88 = scmp.ne.s32.totalorder %s73, %s87
    %p89 = scmp.eq.s32.totalorder %s16, 0
    %p90 = por %p88, %p89
    %s92 = sadd.s32 %s91, 1
    %p95 = scmp.eq.s32.totalorder %s10, 1
    %p96 = scmp.ne.s32.totalorder %s91, %s93
    %p97 = scmp.eq.s32.totalorder %s10, 0
    %p98 = por %p96, %p97
    %p99 = scmp.ne.s32.totalorder %s91, %s93
    %p100 = scmp.eq.s32.totalorder %s15, 1
    %p101 = por %p99, %p100
    %p102 = scmp.ne.s32.totalorder %s93, %s94
    %p103 = scmp.eq.s32.totalorder %s15, 0
    %p104 = por %p102, %p103
    %p105 = scmp.ne.s32.totalorder %s93, %s94
    %p106 = scmp.eq.s32.totalorder %s16, 1
    %p107 = por %p105, %p106
    %p109 = scmp.ne.s32.totalorder %s94, %s108
    %p110 = scmp.eq.s32.totalorder %s16, 0
    %p111 = por %p109, %p110
    %s112 = ssub.s32 %s10, %s17
    %p113 = scmp.eq.s32.totalorder %s112, 0
    %s115 = sadd.s32 %s114, 1
    %s116 = scalar_select %p113, %s114, %s115
    %p119 = pneg %p113
    %p120 = scmp.eq.s32.totalorder %s10, 1
    %p121 = por %p119, %p120
    %p122 = scmp.ne.s32.totalorder %s114, %s117
    %p123 = scmp.eq.s32.totalorder %s10, 0
    %p124 = por %p122, %p123
    %p125 = scmp.ne.s32.totalorder %s114, %s117
    %p126 = scmp.eq.s32.totalorder %s15, 1
    %p127 = por %p125, %p126
    %p128 = scmp.ne.s32.totalorder %s117, %s118
    %p129 = scmp.eq.s32.totalorder %s15, 0
    %p130 = por %p128, %p129
    %p131 = scmp.ne.s32.totalorder %s117, %s118
    %p132 = scmp.eq.s32.totalorder %s16, 1
    %p133 = por %p131, %p132
    %p135 = scmp.ne.s32.totalorder %s118, %s134
    %p136 = scmp.eq.s32.totalorder %s16, 0
    %p137 = por %p135, %p136
    %p138 = scmp.le.s32.totalorder 1, %s10
    %p139 = scmp.lt.s32.totalorder %s10, 3
    %p140 = pnand %p138, %p139
    %p141 = pneg %p140
    // Predicated region
    $region9: #{discriminator_forward_batched.1} parent=5 // pred_check
      _
    $region10: #{discriminator_forward_batched.1} parent=5 // pred_check_branch
      %143 = sbr.rel (%p140) target = $region12
    $region11: #{discriminator_forward_batched.1} parent=5 // pred_region
      %s144 = ssub.s32 %s10, 1
      // Predicated region
      $region13: #{discriminator_forward_batched.1} parent=11 // pred_check
        %p145 = pneg %p83
      $region14: #{discriminator_forward_batched.1} parent=11 // pred_check_branch
        %147 = sbr.rel (%p145) target = $region16
      $region15: #{discriminator_forward_batched.1} parent=11 // pred_region
        _
      $region16: #{discriminator_forward_batched.1} parent=11 // pred_fallthru
        _
      // Predicated region
      $region17: #{discriminator_forward_batched.1} parent=11 // pred_check
        %p148 = pneg %p104
      $region18: #{discriminator_forward_batched.1} parent=11 // pred_check_branch
        %150 = sbr.rel (%p148) target = $region20
      $region19: #{discriminator_forward_batched.1} parent=11 // pred_region
        _
      $region20: #{discriminator_forward_batched.1} parent=11 // pred_fallthru
        _
    $region12: #{discriminator_forward_batched.1} parent=5 // pred_fallthru
      _
    %p151 = scmp.lt.s32.totalorder %s10, 2
    // Predicated region
    $region21: #{discriminator_forward_batched.1} parent=5 // pred_check
      %p152 = pneg %p151
    $region22: #{discriminator_forward_batched.1} parent=5 // pred_check_branch
      %154 = sbr.rel (%p152) target = $region24
    $region23: #{discriminator_forward_batched.1} parent=5 // pred_region
      // Predicated region
      $region25: #{discriminator_forward_batched.1} parent=23 // pred_check
        %p155 = pneg %p30
      $region26: #{discriminator_forward_batched.1} parent=23 // pred_check_branch
        %157 = sbr.rel (%p155) target = $region28
      $region27: #{discriminator_forward_batched.1} parent=23 // pred_region
        %s158 = smul.u32 16, %s10
        %p159 = scmp.lt.s32.totalorder %s158, 31
        %s160 = scalar_select %p159, %s158, 31
        %s161 = smul.addr %s160, 7
        %s162 = smul.addr %s161, 8
        %s163 = scalar_lea.vmem %s0, %s162
        %s164 = smul.u32 16, %s10
      $region28: #{discriminator_forward_batched.1} parent=23 // pred_fallthru
        _
      // Predicated region
      $region29: #{discriminator_forward_batched.1} parent=23 // pred_check
        %p165 = pneg %p56
      $region30: #{discriminator_forward_batched.1} parent=23 // pred_check_branch
        %167 = sbr.rel (%p165) target = $region32
      $region31: #{discriminator_forward_batched.1} parent=23 // pred_region
        %s168 = smul.u32 16, %s10
        %p169 = scmp.lt.s32.totalorder %s168, 31
        %s170 = scalar_select %p169, %s168, 31
        %s171 = smul.addr %s170, 8
        %s172 = scalar_lea.vmem %s1, %s171
        %s173 = smul.u32 16, %s10
      $region32: #{discriminator_forward_batched.1} parent=23 // pred_fallthru
        _
    $region24: #{discriminator_forward_batched.1} parent=5 // pred_fallthru
      _
    %p174 = scmp.le.s32.totalorder 1, %s10
    %p175 = scmp.lt.s32.totalorder %s10, 3
    %p176 = pnand %p174, %p175
    %p177 = pneg %p176
    // Predicated region
    $region33: #{discriminator_forward_batched.1} parent=5 // pred_check
      _
    $region34: #{discriminator_forward_batched.1} parent=5 // pred_check_branch
      %179 = sbr.rel (%p176) target = $region36
    $region35: #{discriminator_forward_batched.1} parent=5 // pred_region
      %s180 = ssub.s32 %s10, 1
      %s181 = smul.u32 16, %s15
      %p182 = scmp.lt.s32.totalorder %s181, 31
      %s183 = scalar_select %p182, %s181, 31
      %s184 = smul.addr %s183, 7
      %s185 = smul.addr %s184, 8
      %s186 = scalar_lea.vmem %s0, %s185
      %p187 = pneg %p36
      %p188 = pneg %p33
      %s189 = smul.u32 16, %s15
      %p190 = scmp.lt.s32.totalorder %s189, 31
      %s191 = scalar_select %p190, %s189, 31
      %s192 = smul.addr %s191, 8
      %s193 = scalar_lea.vmem %s1, %s192
      %p194 = pneg %p62
      %p195 = pneg %p59
      %p196 = pneg %p83
      %p197 = pneg %p80
      %p198 = pneg %p104
      %p199 = pneg %p101
      %p200 = pneg %p130
      %p201 = pneg %p127
      %s202 = smul.u32 16, %s15
      %p203 = scmp.lt.s32.totalorder %s202, 31
      %s204 = scalar_select %p203, %s202, 31
      %s205 = smul.addr %s204, 8
      %s206 = scalar_lea.vmem %s4, %s205
      %s207 = smul.u32 16, %s15
      %p208 = scmp.lt.s32.totalorder %s207, 31
      %s209 = scalar_select %p208, %s207, 31
      %s210 = smul.addr %s209, 7
      %s211 = smul.addr %s210, 8
      %s212 = scalar_lea.vmem %s0, %s211
      %s213 = smul.u32 16, %s15
      %s214 = smul.u32 16, %s15
      %p215 = scmp.lt.s32.totalorder %s214, 31
      %s216 = scalar_select %p215, %s214, 31
      %s217 = smul.addr %s216, 8
      %s218 = scalar_lea.vmem %s1, %s217
      %s219 = smul.u32 16, %s15
      %s220 = smul.u32 16, %s15
      %p221 = scmp.lt.s32.totalorder %s220, 31
      %s222 = scalar_select %p221, %s220, 31
      %s223 = smul.addr %s222, 8
      %s224 = scalar_lea.vmem %s4, %s223
      %s225 = smul.u32 16, %s15
      %v227 = vld [vmem:[%s212] sm:$0xff]
      %v228 = vld [vmem:[%s212 + $0x8] sm:$0xff]
      %v229 = vld [vmem:[%s212 + $0x10] sm:$0xff]
      %v230 = vld [vmem:[%s212 + $0x18] sm:$0xff]
      %v231 = vld [vmem:[%s212 + $0x20] sm:$0xff]
      %v232 = vld [vmem:[%s212 + $0x28] sm:$0xff]
      %v233 = vld [vmem:[%s212 + $0x30] sm:$0xff]
      %v234 = vld [vmem:[%s212 + $0x38] sm:$0xff]
      %v235 = vld [vmem:[%s212 + $0x40] sm:$0xff]
      %v236 = vld [vmem:[%s212 + $0x48] sm:$0xff]
      %v237 = vld [vmem:[%s212 + $0x50] sm:$0xff]
      %v238 = vld [vmem:[%s212 + $0x58] sm:$0xff]
      %v239 = vld [vmem:[%s212 + $0x60] sm:$0xff]
      %v240 = vld [vmem:[%s212 + $0x68] sm:$0xff]
      %v241 = vld [vmem:[%s212 + $0x70] sm:$0xff]
      %v242 = vld [vmem:[%s212 + $0x78] sm:$0xff]
      %v243 = vld [vmem:[%s212 + $0x80] sm:$0xff]
      %v244 = vld [vmem:[%s212 + $0x88] sm:$0xff]
      %v245 = vld [vmem:[%s212 + $0x90] sm:$0xff]
      %v246 = vld [vmem:[%s212 + $0x98] sm:$0xff]
      %v247 = vld [vmem:[%s212 + $0xa0] sm:$0xff]
      %v248 = vld [vmem:[%s212 + $0xa8] sm:$0xff]
      %v249 = vld [vmem:[%s212 + $0xb0] sm:$0xff]
      %v250 = vld [vmem:[%s212 + $0xb8] sm:$0xff]
      %v251 = vld [vmem:[%s212 + $0xc0] sm:$0xff]
      %v252 = vld [vmem:[%s212 + $0xc8] sm:$0xff]
      %v253 = vld [vmem:[%s212 + $0xd0] sm:$0xff]
      %v254 = vld [vmem:[%s212 + $0xd8] sm:$0xff]
      %v255 = vld [vmem:[%s212 + $0xe0] sm:$0xff]
      %v256 = vld [vmem:[%s212 + $0xe8] sm:$0xff]
      %v257 = vld [vmem:[%s212 + $0xf0] sm:$0xff]
      %v258 = vld [vmem:[%s212 + $0xf8] sm:$0xff]
      %v259 = vld [vmem:[%s212 + $0x100] sm:$0xff]
      %v260 = vld [vmem:[%s212 + $0x108] sm:$0xff]
      %v261 = vld [vmem:[%s212 + $0x110] sm:$0xff]
      %v262 = vld [vmem:[%s212 + $0x118] sm:$0xff]
      %v263 = vld [vmem:[%s212 + $0x120] sm:$0xff]
      %v264 = vld [vmem:[%s212 + $0x128] sm:$0xff]
      %v265 = vld [vmem:[%s212 + $0x130] sm:$0xff]
      %v266 = vld [vmem:[%s212 + $0x138] sm:$0xff]
      %v267 = vld [vmem:[%s212 + $0x140] sm:$0xff]
      %v268 = vld [vmem:[%s212 + $0x148] sm:$0xff]
      %v269 = vld [vmem:[%s212 + $0x150] sm:$0xff]
      %v270 = vld [vmem:[%s212 + $0x158] sm:$0xff]
      %v271 = vld [vmem:[%s212 + $0x160] sm:$0xff]
      %v272 = vld [vmem:[%s212 + $0x168] sm:$0xff]
      %v273 = vld [vmem:[%s212 + $0x170] sm:$0xff]
      %v274 = vld [vmem:[%s212 + $0x178] sm:$0xff]
      %v275 = vld [vmem:[%s212 + $0x180] sm:$0xff]
      %v276 = vld [vmem:[%s212 + $0x188] sm:$0xff]
      %v277 = vld [vmem:[%s212 + $0x190] sm:$0xff]
      %v278 = vld [vmem:[%s212 + $0x198] sm:$0xff]
      %v279 = vld [vmem:[%s212 + $0x1a0] sm:$0xff]
      %v280 = vld [vmem:[%s212 + $0x1a8] sm:$0xff]
      %v281 = vld [vmem:[%s212 + $0x1b0] sm:$0xff]
      %v282 = vld [vmem:[%s212 + $0x1b8] sm:$0xff]
      %v283 = vld [vmem:[%s212 + $0x1c0] sm:$0xff]
      %v284 = vld [vmem:[%s212 + $0x1c8] sm:$0xff]
      %v285 = vld [vmem:[%s212 + $0x1d0] sm:$0xff]
      %v286 = vld [vmem:[%s212 + $0x1d8] sm:$0xff]
      %v287 = vld [vmem:[%s212 + $0x1e0] sm:$0xff]
      %v288 = vld [vmem:[%s212 + $0x1e8] sm:$0xff]
      %v289 = vld [vmem:[%s212 + $0x1f0] sm:$0xff]
      %v290 = vld [vmem:[%s212 + $0x1f8] sm:$0xff]
      %v291 = vld [vmem:[%s212 + $0x200] sm:$0xff]
      %v292 = vld [vmem:[%s212 + $0x208] sm:$0xff]
      %v293 = vld [vmem:[%s212 + $0x210] sm:$0xff]
      %v294 = vld [vmem:[%s212 + $0x218] sm:$0xff]
      %v295 = vld [vmem:[%s212 + $0x220] sm:$0xff]
      %v296 = vld [vmem:[%s212 + $0x228] sm:$0xff]
      %v297 = vld [vmem:[%s212 + $0x230] sm:$0xff]
      %v298 = vld [vmem:[%s212 + $0x238] sm:$0xff]
      %v299 = vld [vmem:[%s212 + $0x240] sm:$0xff]
      %v300 = vld [vmem:[%s212 + $0x248] sm:$0xff]
      %v301 = vld [vmem:[%s212 + $0x250] sm:$0xff]
      %v302 = vld [vmem:[%s212 + $0x258] sm:$0xff]
      %v303 = vld [vmem:[%s212 + $0x260] sm:$0xff]
      %v304 = vld [vmem:[%s212 + $0x268] sm:$0xff]
      %v305 = vld [vmem:[%s212 + $0x270] sm:$0xff]
      %v306 = vld [vmem:[%s212 + $0x278] sm:$0xff]
      %v307 = vld [vmem:[%s212 + $0x280] sm:$0xff]
      %v308 = vld [vmem:[%s212 + $0x288] sm:$0xff]
      %v309 = vld [vmem:[%s212 + $0x290] sm:$0xff]
      %v310 = vld [vmem:[%s212 + $0x298] sm:$0xff]
      %v311 = vld [vmem:[%s212 + $0x2a0] sm:$0xff]
      %v312 = vld [vmem:[%s212 + $0x2a8] sm:$0xff]
      %v313 = vld [vmem:[%s212 + $0x2b0] sm:$0xff]
      %v314 = vld [vmem:[%s212 + $0x2b8] sm:$0xff]
      %v315 = vld [vmem:[%s212 + $0x2c0] sm:$0xff]
      %v316 = vld [vmem:[%s212 + $0x2c8] sm:$0xff]
      %v317 = vld [vmem:[%s212 + $0x2d0] sm:$0xff]
      %v318 = vld [vmem:[%s212 + $0x2d8] sm:$0xff]
      %v319 = vld [vmem:[%s212 + $0x2e0] sm:$0xff]
      %v320 = vld [vmem:[%s212 + $0x2e8] sm:$0xff]
      %v321 = vld [vmem:[%s212 + $0x2f0] sm:$0xff]
      %v322 = vld [vmem:[%s212 + $0x2f8] sm:$0xff]
      %v323 = vld [vmem:[%s212 + $0x300] sm:$0xff]
      %v324 = vld [vmem:[%s212 + $0x308] sm:$0xff]
      %v325 = vld [vmem:[%s212 + $0x310] sm:$0xff]
      %v326 = vld [vmem:[%s212 + $0x318] sm:$0xff]
      %v327 = vld [vmem:[%s212 + $0x320] sm:$0xff]
      %v328 = vld [vmem:[%s212 + $0x328] sm:$0xff]
      %v329 = vld [vmem:[%s212 + $0x330] sm:$0xff]
      %v330 = vld [vmem:[%s212 + $0x338] sm:$0xff]
      %v331 = vld [vmem:[%s212 + $0x340] sm:$0xff]
      %v332 = vld [vmem:[%s212 + $0x348] sm:$0xff]
      %v333 = vld [vmem:[%s212 + $0x350] sm:$0xff]
      %v334 = vld [vmem:[%s212 + $0x358] sm:$0xff]
      %v335 = vld [vmem:[%s212 + $0x360] sm:$0xff]
      %v336 = vld [vmem:[%s212 + $0x368] sm:$0xff]
      %v337 = vld [vmem:[%s212 + $0x370] sm:$0xff]
      %v338 = vld [vmem:[%s212 + $0x378] sm:$0xff]
      %v339 = vpack.c.bf16 %v234, %v227
      %v340 = vpack.c.bf16 %v235, %v228
      %v341 = vpack.c.bf16 %v236, %v229
      %v342 = vpack.c.bf16 %v237, %v230
      %v343 = vpack.c.bf16 %v238, %v231
      %v344 = vpack.c.bf16 %v239, %v232
      %v345 = vpack.c.bf16 %v240, %v233
      %v346 = vpack.c.bf16 %v248, %v241
      %v347 = vpack.c.bf16 %v249, %v242
      %v348 = vpack.c.bf16 %v250, %v243
      %v349 = vpack.c.bf16 %v251, %v244
      %v350 = vpack.c.bf16 %v252, %v245
      %v351 = vpack.c.bf16 %v253, %v246
      %v352 = vpack.c.bf16 %v254, %v247
      %v353 = vpack.c.bf16 %v262, %v255
      %v354 = vpack.c.bf16 %v263, %v256
      %v355 = vpack.c.bf16 %v264, %v257
      %v356 = vpack.c.bf16 %v265, %v258
      %v357 = vpack.c.bf16 %v266, %v259
      %v358 = vpack.c.bf16 %v267, %v260
      %v359 = vpack.c.bf16 %v268, %v261
      %v360 = vpack.c.bf16 %v276, %v269
      %v361 = vpack.c.bf16 %v277, %v270
      %v362 = vpack.c.bf16 %v278, %v271
      %v363 = vpack.c.bf16 %v279, %v272
      %v364 = vpack.c.bf16 %v280, %v273
      %v365 = vpack.c.bf16 %v281, %v274
      %v366 = vpack.c.bf16 %v282, %v275
      %v367 = vpack.c.bf16 %v290, %v283
      %v368 = vpack.c.bf16 %v291, %v284
      %v369 = vpack.c.bf16 %v292, %v285
      %v370 = vpack.c.bf16 %v293, %v286
      %v371 = vpack.c.bf16 %v294, %v287
      %v372 = vpack.c.bf16 %v295, %v288
      %v373 = vpack.c.bf16 %v296, %v289
      %v374 = vpack.c.bf16 %v304, %v297
      %v375 = vpack.c.bf16 %v305, %v298
      %v376 = vpack.c.bf16 %v306, %v299
      %v377 = vpack.c.bf16 %v307, %v300
      %v378 = vpack.c.bf16 %v308, %v301
      %v379 = vpack.c.bf16 %v309, %v302
      %v380 = vpack.c.bf16 %v310, %v303
      %v381 = vpack.c.bf16 %v318, %v311
      %v382 = vpack.c.bf16 %v319, %v312
      %v383 = vpack.c.bf16 %v320, %v313
      %v384 = vpack.c.bf16 %v321, %v314
      %v385 = vpack.c.bf16 %v322, %v315
      %v386 = vpack.c.bf16 %v323, %v316
      %v387 = vpack.c.bf16 %v324, %v317
      %v388 = vpack.c.bf16 %v332, %v325
      %v389 = vpack.c.bf16 %v333, %v326
      %v390 = vpack.c.bf16 %v334, %v327
      %v391 = vpack.c.bf16 %v335, %v328
      %v392 = vpack.c.bf16 %v336, %v329
      %v393 = vpack.c.bf16 %v337, %v330
      %v394 = vpack.c.bf16 %v338, %v331
      %v395 = vld [vmem:[%s2] sm:$0xff]
      %v396 = vld [vmem:[%s2 + $0x8] sm:$0xff]
      %v397 = vld [vmem:[%s2 + $0x10] sm:$0xff]
      %v398 = vld [vmem:[%s2 + $0x18] sm:$0xff]
      %v399 = vld [vmem:[%s2 + $0x20] sm:$0xff]
      %v400 = vld [vmem:[%s2 + $0x28] sm:$0xff]
      %v401 = vld [vmem:[%s2 + $0x30] sm:$0xff]
      %v402 = vld [vmem:[%s2 + $0x38] sm:$0xff]
      %v403 = vld [vmem:[%s2 + $0x40] sm:$0xff]
      %v404 = vld [vmem:[%s2 + $0x48] sm:$0xff]
      %v405 = vld [vmem:[%s2 + $0x50] sm:$0xff]
      %v406 = vld [vmem:[%s2 + $0x58] sm:$0xff]
      %v407 = vld [vmem:[%s2 + $0x60] sm:$0xff]
      %v408 = vld [vmem:[%s2 + $0x68] sm:$0xff]
      %v409 = vld [vmem:[%s2 + $0x70] sm:$0xff]
      %v410 = vld [vmem:[%s2 + $0x78] sm:$0xff]
      %v411 = vld [vmem:[%s2 + $0x80] sm:$0xff]
      %v412 = vld [vmem:[%s2 + $0x88] sm:$0xff]
      %v413 = vld [vmem:[%s2 + $0x90] sm:$0xff]
      %v414 = vld [vmem:[%s2 + $0x98] sm:$0xff]
      %v415 = vld [vmem:[%s2 + $0xa0] sm:$0xff]
      %v416 = vld [vmem:[%s2 + $0xa8] sm:$0xff]
      %v417 = vld [vmem:[%s2 + $0xb0] sm:$0xff]
      %v418 = vld [vmem:[%s2 + $0xb8] sm:$0xff]
      %v419 = vld [vmem:[%s2 + $0xc0] sm:$0xff]
      %v420 = vld [vmem:[%s2 + $0xc8] sm:$0xff]
      %v421 = vld [vmem:[%s2 + $0xd0] sm:$0xff]
      %v422 = vld [vmem:[%s2 + $0xd8] sm:$0xff]
      %v423 = vld [vmem:[%s2 + $0xe0] sm:$0xff]
      %v424 = vld [vmem:[%s2 + $0xe8] sm:$0xff]
      %v425 = vld [vmem:[%s2 + $0xf0] sm:$0xff]
      %v426 = vld [vmem:[%s2 + $0xf8] sm:$0xff]
      %v427 = vld [vmem:[%s2 + $0x100] sm:$0xff]
      %v428 = vld [vmem:[%s2 + $0x108] sm:$0xff]
      %v429 = vld [vmem:[%s2 + $0x110] sm:$0xff]
      %v430 = vld [vmem:[%s2 + $0x118] sm:$0xff]
      %v431 = vld [vmem:[%s2 + $0x120] sm:$0xff]
      %v432 = vld [vmem:[%s2 + $0x128] sm:$0xff]
      %v433 = vld [vmem:[%s2 + $0x130] sm:$0xff]
      %v434 = vld [vmem:[%s2 + $0x138] sm:$0xff]
      %v435 = vld [vmem:[%s2 + $0x140] sm:$0xff]
      %v436 = vld [vmem:[%s2 + $0x148] sm:$0xff]
      %v437 = vld [vmem:[%s2 + $0x150] sm:$0xff]
      %v438 = vld [vmem:[%s2 + $0x158] sm:$0xff]
      %v439 = vld [vmem:[%s2 + $0x160] sm:$0xff]
      %v440 = vld [vmem:[%s2 + $0x168] sm:$0xff]
      %v441 = vld [vmem:[%s2 + $0x170] sm:$0xff]
      %v442 = vld [vmem:[%s2 + $0x178] sm:$0xff]
      %v443 = vld [vmem:[%s2 + $0x180] sm:$0xff]
      %v444 = vld [vmem:[%s2 + $0x188] sm:$0xff]
      %v445 = vld [vmem:[%s2 + $0x190] sm:$0xff]
      %v446 = vld [vmem:[%s2 + $0x198] sm:$0xff]
      %v447 = vld [vmem:[%s2 + $0x1a0] sm:$0xff]
      %v448 = vld [vmem:[%s2 + $0x1a8] sm:$0xff]
      %v449 = vld [vmem:[%s2 + $0x1b0] sm:$0xff]
      %v450 = vld [vmem:[%s2 + $0x1b8] sm:$0xff]
      %v451 = vld [vmem:[%s2 + $0x1c0] sm:$0xff]
      %v452 = vld [vmem:[%s2 + $0x1c8] sm:$0xff]
      %v453 = vld [vmem:[%s2 + $0x1d0] sm:$0xff]
      %v454 = vld [vmem:[%s2 + $0x1d8] sm:$0xff]
      %v455 = vld [vmem:[%s2 + $0x1e0] sm:$0xff]
      %v456 = vld [vmem:[%s2 + $0x1e8] sm:$0xff]
      %v457 = vld [vmem:[%s2 + $0x1f0] sm:$0xff]
      %v458 = vld [vmem:[%s2 + $0x1f8] sm:$0xff]
      %v459 = vld [vmem:[%s2 + $0x200] sm:$0xff]
      %v460 = vld [vmem:[%s2 + $0x208] sm:$0xff]
      %v461 = vld [vmem:[%s2 + $0x210] sm:$0xff]
      %v462 = vld [vmem:[%s2 + $0x218] sm:$0xff]
      %v463 = vld [vmem:[%s2 + $0x220] sm:$0xff]
      %v464 = vld [vmem:[%s2 + $0x228] sm:$0xff]
      %v465 = vld [vmem:[%s2 + $0x230] sm:$0xff]
      %v466 = vld [vmem:[%s2 + $0x238] sm:$0xff]
      %v467 = vld [vmem:[%s2 + $0x240] sm:$0xff]
      %v468 = vld [vmem:[%s2 + $0x248] sm:$0xff]
      %v469 = vld [vmem:[%s2 + $0x250] sm:$0xff]
      %v470 = vld [vmem:[%s2 + $0x258] sm:$0xff]
      %v471 = vld [vmem:[%s2 + $0x260] sm:$0xff]
      %v472 = vld [vmem:[%s2 + $0x268] sm:$0xff]
      %v473 = vld [vmem:[%s2 + $0x270] sm:$0xff]
      %v474 = vld [vmem:[%s2 + $0x278] sm:$0xff]
      %v475 = vld [vmem:[%s2 + $0x280] sm:$0xff]
      %v476 = vld [vmem:[%s2 + $0x288] sm:$0xff]
      %v477 = vld [vmem:[%s2 + $0x290] sm:$0xff]
      %v478 = vld [vmem:[%s2 + $0x298] sm:$0xff]
      %v479 = vld [vmem:[%s2 + $0x2a0] sm:$0xff]
      %v480 = vld [vmem:[%s2 + $0x2a8] sm:$0xff]
      %v481 = vld [vmem:[%s2 + $0x2b0] sm:$0xff]
      %v482 = vld [vmem:[%s2 + $0x2b8] sm:$0xff]
      %v483 = vld [vmem:[%s2 + $0x2c0] sm:$0xff]
      %v484 = vld [vmem:[%s2 + $0x2c8] sm:$0xff]
      %v485 = vld [vmem:[%s2 + $0x2d0] sm:$0xff]
      %v486 = vld [vmem:[%s2 + $0x2d8] sm:$0xff]
      %v487 = vld [vmem:[%s2 + $0x2e0] sm:$0xff]
      %v488 = vld [vmem:[%s2 + $0x2e8] sm:$0xff]
      %v489 = vld [vmem:[%s2 + $0x2f0] sm:$0xff]
      %v490 = vld [vmem:[%s2 + $0x2f8] sm:$0xff]
      %v491 = vld [vmem:[%s2 + $0x300] sm:$0xff]
      %v492 = vld [vmem:[%s2 + $0x308] sm:$0xff]
      %v493 = vld [vmem:[%s3] sm:$0xff]
      %v494 = vld [vmem:[%s218] sm:$0xff]
      %v495 = vld [vmem:[%s218 + $0x8] sm:$0xff]
      %v496 = vld [vmem:[%s218 + $0x10] sm:$0xff]
      %v497 = vld [vmem:[%s218 + $0x18] sm:$0xff]
      %v498 = vld [vmem:[%s218 + $0x20] sm:$0xff]
      %v499 = vld [vmem:[%s218 + $0x28] sm:$0xff]
      %v500 = vld [vmem:[%s218 + $0x30] sm:$0xff]
      %v501 = vld [vmem:[%s218 + $0x38] sm:$0xff]
      %v502 = vld [vmem:[%s218 + $0x40] sm:$0xff]
      %v503 = vld [vmem:[%s218 + $0x48] sm:$0xff]
      %v504 = vld [vmem:[%s218 + $0x50] sm:$0xff]
      %v505 = vld [vmem:[%s218 + $0x58] sm:$0xff]
      %v506 = vld [vmem:[%s218 + $0x60] sm:$0xff]
      %v507 = vld [vmem:[%s218 + $0x68] sm:$0xff]
      %v508 = vld [vmem:[%s218 + $0x70] sm:$0xff]
      %v509 = vld [vmem:[%s218 + $0x78] sm:$0xff]
      %511 = vset.pattern.permute.xlu0 0
      %512 = vperm.xlu0 %511, %v494
      %v513 = vpop.permute.xlu0 %512
      %516 = vset.pattern.permute.xlu0 0
      %517 = vperm.xlu0 %516, %v495
      %v518 = vpop.permute.xlu0 %517
      %521 = vset.pattern.permute.xlu0 0
      %522 = vperm.xlu0 %521, %v496
      %v523 = vpop.permute.xlu0 %522
      %526 = vset.pattern.permute.xlu0 0
      %527 = vperm.xlu0 %526, %v497
      %v528 = vpop.permute.xlu0 %527
      %531 = vset.pattern.permute.xlu0 0
      %532 = vperm.xlu0 %531, %v498
      %v533 = vpop.permute.xlu0 %532
      %536 = vset.pattern.permute.xlu0 0
      %537 = vperm.xlu0 %536, %v499
      %v538 = vpop.permute.xlu0 %537
      %541 = vset.pattern.permute.xlu0 0
      %542 = vperm.xlu0 %541, %v500
      %v543 = vpop.permute.xlu0 %542
      %546 = vset.pattern.permute.xlu0 0
      %547 = vperm.xlu0 %546, %v501
      %v548 = vpop.permute.xlu0 %547
      %551 = vset.pattern.permute.xlu0 0
      %552 = vperm.xlu0 %551, %v502
      %v553 = vpop.permute.xlu0 %552
      %556 = vset.pattern.permute.xlu0 0
      %557 = vperm.xlu0 %556, %v503
      %v558 = vpop.permute.xlu0 %557
      %561 = vset.pattern.permute.xlu0 0
      %562 = vperm.xlu0 %561, %v504
      %v563 = vpop.permute.xlu0 %562
      %566 = vset.pattern.permute.xlu0 0
      %567 = vperm.xlu0 %566, %v505
      %v568 = vpop.permute.xlu0 %567
      %571 = vset.pattern.permute.xlu0 0
      %572 = vperm.xlu0 %571, %v506
      %v573 = vpop.permute.xlu0 %572
      %576 = vset.pattern.permute.xlu0 0
      %577 = vperm.xlu0 %576, %v507
      %v578 = vpop.permute.xlu0 %577
      %581 = vset.pattern.permute.xlu0 0
      %582 = vperm.xlu0 %581, %v508
      %v583 = vpop.permute.xlu0 %582
      %586 = vset.pattern.permute.xlu0 0
      %587 = vperm.xlu0 %586, %v509
      %v588 = vpop.permute.xlu0 %587
      %v591 = vlaneseq
      %v592 = vshrl.u32 %v591, 7
      %v593 = vsub.s32 1, %v592
      %v594 = vrot.slane %v493, %v593
      %v595 = vlaneseq
      %v596 = vshrl.u32 %v595, 7
      %v597 = vsub.s32 5, %v596
      %v598 = vrot.slane %v493, %v597
      %v601 = vlaneseq
      %v602 = vshrl.u32 %v601, 7
      %v603 = vsub.s32 1, %v602
      %v604 = vrot.slane %v594, %v603
      %v605 = vlaneseq
      %v606 = vshrl.u32 %v605, 7
      %v607 = vsub.s32 1, %v606
      %v608 = vrot.slane %v598, %v607
      %v609 = vmul.f32 %v513, %v604
      %v610 = vmul.f32 %v513, %v608
      %v611 = vmul.f32 %v518, %v604
      %v612 = vmul.f32 %v518, %v608
      %v613 = vmul.f32 %v523, %v604
      %v614 = vmul.f32 %v523, %v608
      %v615 = vmul.f32 %v528, %v604
      %v616 = vmul.f32 %v528, %v608
      %v617 = vmul.f32 %v533, %v604
      %v618 = vmul.f32 %v533, %v608
      %v619 = vmul.f32 %v538, %v604
      %v620 = vmul.f32 %v538, %v608
      %v621 = vmul.f32 %v543, %v604
      %v622 = vmul.f32 %v543, %v608
      %v623 = vmul.f32 %v548, %v604
      %v624 = vmul.f32 %v548, %v608
      %v625 = vmul.f32 %v553, %v604
      %v626 = vmul.f32 %v553, %v608
      %v627 = vmul.f32 %v558, %v604
      %v628 = vmul.f32 %v558, %v608
      %v629 = vmul.f32 %v563, %v604
      %v630 = vmul.f32 %v563, %v608
      %v631 = vmul.f32 %v568, %v604
      %v632 = vmul.f32 %v568, %v608
      %v633 = vmul.f32 %v573, %v604
      %v634 = vmul.f32 %v573, %v608
      %v635 = vmul.f32 %v578, %v604
      %v636 = vmul.f32 %v578, %v608
      %v637 = vmul.f32 %v583, %v604
      %v638 = vmul.f32 %v583, %v608
      %v639 = vmul.f32 %v588, %v604
      %v640 = vmul.f32 %v588, %v608
      %v739 = vunpack.c.l.b16 %v395
      %v740 = vunpack.c.h.b16 %v395
      %v741 = vunpack.c.l.b16 %v396
      %v742 = vunpack.c.h.b16 %v396
      %v743 = vunpack.c.l.b16 %v397
      %v744 = vunpack.c.h.b16 %v397
      %v745 = vunpack.c.l.b16 %v398
      %v746 = vunpack.c.h.b16 %v398
      %v747 = vunpack.c.l.b16 %v399
      %v748 = vunpack.c.h.b16 %v399
      %v749 = vunpack.c.l.b16 %v400
      %v750 = vunpack.c.h.b16 %v400
      %v751 = vunpack.c.l.b16 %v401
      %v752 = vunpack.c.h.b16 %v401
      %v753 = vunpack.c.l.b16 %v402
      %v754 = vunpack.c.h.b16 %v402
      %v755 = vunpack.c.l.b16 %v403
      %v756 = vunpack.c.h.b16 %v403
      %v757 = vunpack.c.l.b16 %v404
      %v758 = vunpack.c.h.b16 %v404
      %v759 = vunpack.c.l.b16 %v405
      %v760 = vunpack.c.h.b16 %v405
      %v761 = vunpack.c.l.b16 %v406
      %v762 = vunpack.c.h.b16 %v406
      %v763 = vunpack.c.l.b16 %v407
      %v764 = vunpack.c.h.b16 %v407
      %v765 = vunpack.c.l.b16 %v408
      %v766 = vunpack.c.h.b16 %v408
      %v767 = vunpack.c.l.b16 %v409
      %v768 = vunpack.c.h.b16 %v409
      %v769 = vunpack.c.l.b16 %v410
      %v770 = vunpack.c.h.b16 %v410
      %v771 = vunpack.c.l.b16 %v411
      %v772 = vunpack.c.h.b16 %v411
      %v773 = vunpack.c.l.b16 %v412
      %v774 = vunpack.c.h.b16 %v412
      %v775 = vunpack.c.l.b16 %v413
      %v776 = vunpack.c.h.b16 %v413
      %v777 = vunpack.c.l.b16 %v414
      %v778 = vunpack.c.h.b16 %v414
      %v779 = vunpack.c.l.b16 %v415
      %v780 = vunpack.c.h.b16 %v415
      %v781 = vunpack.c.l.b16 %v416
      %v782 = vunpack.c.h.b16 %v416
      %v783 = vunpack.c.l.b16 %v417
      %v784 = vunpack.c.h.b16 %v417
      %v785 = vunpack.c.l.b16 %v418
      %v786 = vunpack.c.h.b16 %v418
      %v787 = vunpack.c.l.b16 %v419
      %v788 = vunpack.c.h.b16 %v419
      %v789 = vunpack.c.l.b16 %v420
      %v790 = vunpack.c.h.b16 %v420
      %v791 = vunpack.c.l.b16 %v421
      %v792 = vunpack.c.h.b16 %v421
      %v793 = vunpack.c.l.b16 %v422
      %v794 = vunpack.c.h.b16 %v422
      %v795 = vunpack.c.l.b16 %v423
      %v796 = vunpack.c.h.b16 %v423
      %v797 = vunpack.c.l.b16 %v424
      %v798 = vunpack.c.h.b16 %v424
      %v799 = vunpack.c.l.b16 %v425
      %v800 = vunpack.c.h.b16 %v425
      %v801 = vunpack.c.l.b16 %v426
      %v802 = vunpack.c.h.b16 %v426
      %v803 = vunpack.c.l.b16 %v427
      %v804 = vunpack.c.h.b16 %v427
      %v805 = vunpack.c.l.b16 %v428
      %v806 = vunpack.c.h.b16 %v428
      %v807 = vunpack.c.l.b16 %v429
      %v808 = vunpack.c.h.b16 %v429
      %v809 = vunpack.c.l.b16 %v430
      %v810 = vunpack.c.h.b16 %v430
      %v811 = vunpack.c.l.b16 %v431
      %v812 = vunpack.c.h.b16 %v431
      %v813 = vunpack.c.l.b16 %v432
      %v814 = vunpack.c.h.b16 %v432
      %v815 = vunpack.c.l.b16 %v433
      %v816 = vunpack.c.h.b16 %v433
      %v817 = vunpack.c.l.b16 %v434
      %v818 = vunpack.c.h.b16 %v434
      %v819 = vunpack.c.l.b16 %v435
      %v820 = vunpack.c.h.b16 %v435
      %v821 = vunpack.c.l.b16 %v436
      %v822 = vunpack.c.h.b16 %v436
      %v823 = vunpack.c.l.b16 %v437
      %v824 = vunpack.c.h.b16 %v437
      %v825 = vunpack.c.l.b16 %v438
      %v826 = vunpack.c.h.b16 %v438
      %v827 = vunpack.c.l.b16 %v439
      %v828 = vunpack.c.h.b16 %v439
      %v829 = vunpack.c.l.b16 %v440
      %v830 = vunpack.c.h.b16 %v440
      %v831 = vunpack.c.l.b16 %v441
      %v832 = vunpack.c.h.b16 %v441
      %v833 = vunpack.c.l.b16 %v442
      %v834 = vunpack.c.h.b16 %v442
      %v835 = vunpack.c.l.b16 %v443
      %v836 = vunpack.c.h.b16 %v443
      %v837 = vunpack.c.l.b16 %v444
      %v838 = vunpack.c.h.b16 %v444
      %v839 = vunpack.c.l.b16 %v445
      %v840 = vunpack.c.h.b16 %v445
      %v841 = vunpack.c.l.b16 %v446
      %v842 = vunpack.c.h.b16 %v446
      %v843 = vunpack.c.l.b16 %v447
      %v844 = vunpack.c.h.b16 %v447
      %v845 = vunpack.c.l.b16 %v448
      %v846 = vunpack.c.h.b16 %v448
      %v847 = vunpack.c.l.b16 %v449
      %v848 = vunpack.c.h.b16 %v449
      %v849 = vunpack.c.l.b16 %v450
      %v850 = vunpack.c.h.b16 %v450
      %v851 = vunpack.c.l.b16 %v451
      %v852 = vunpack.c.h.b16 %v451
      %v853 = vunpack.c.l.b16 %v452
      %v854 = vunpack.c.h.b16 %v452
      %v855 = vunpack.c.l.b16 %v453
      %v856 = vunpack.c.h.b16 %v453
      %v857 = vunpack.c.l.b16 %v454
      %v858 = vunpack.c.h.b16 %v454
      %v859 = vunpack.c.l.b16 %v455
      %v860 = vunpack.c.h.b16 %v455
      %v861 = vunpack.c.l.b16 %v456
      %v862 = vunpack.c.h.b16 %v456
      %v863 = vunpack.c.l.b16 %v457
      %v864 = vunpack.c.h.b16 %v457
      %v865 = vunpack.c.l.b16 %v458
      %v866 = vunpack.c.h.b16 %v458
      %v867 = vunpack.c.l.b16 %v459
      %v868 = vunpack.c.h.b16 %v459
      %v869 = vunpack.c.l.b16 %v460
      %v870 = vunpack.c.h.b16 %v460
      %v871 = vunpack.c.l.b16 %v461
      %v872 = vunpack.c.h.b16 %v461
      %v873 = vunpack.c.l.b16 %v462
      %v874 = vunpack.c.h.b16 %v462
      %v875 = vunpack.c.l.b16 %v463
      %v876 = vunpack.c.h.b16 %v463
      %v877 = vunpack.c.l.b16 %v464
      %v878 = vunpack.c.h.b16 %v464
      %v879 = vunpack.c.l.b16 %v465
      %v880 = vunpack.c.h.b16 %v465
      %v881 = vunpack.c.l.b16 %v466
      %v882 = vunpack.c.h.b16 %v466
      %v883 = vunpack.c.l.b16 %v467
      %v884 = vunpack.c.h.b16 %v467
      %v885 = vunpack.c.l.b16 %v468
      %v886 = vunpack.c.h.b16 %v468
      %v887 = vunpack.c.l.b16 %v469
      %v888 = vunpack.c.h.b16 %v469
      %v889 = vunpack.c.l.b16 %v470
      %v890 = vunpack.c.h.b16 %v470
      %v891 = vunpack.c.l.b16 %v471
      %v892 = vunpack.c.h.b16 %v471
      %v893 = vunpack.c.l.b16 %v472
      %v894 = vunpack.c.h.b16 %v472
      %v895 = vunpack.c.l.b16 %v473
      %v896 = vunpack.c.h.b16 %v473
      %v897 = vunpack.c.l.b16 %v474
      %v898 = vunpack.c.h.b16 %v474
      %v899 = vunpack.c.l.b16 %v475
      %v900 = vunpack.c.h.b16 %v475
      %v901 = vunpack.c.l.b16 %v476
      %v902 = vunpack.c.h.b16 %v476
      %v903 = vunpack.c.l.b16 %v477
      %v904 = vunpack.c.h.b16 %v477
      %v905 = vunpack.c.l.b16 %v478
      %v906 = vunpack.c.h.b16 %v478
      %v907 = vunpack.c.l.b16 %v479
      %v908 = vunpack.c.h.b16 %v479
      %v909 = vunpack.c.l.b16 %v480
      %v910 = vunpack.c.h.b16 %v480
      %v911 = vunpack.c.l.b16 %v481
      %v912 = vunpack.c.h.b16 %v481
      %v913 = vunpack.c.l.b16 %v482
      %v914 = vunpack.c.h.b16 %v482
      %v915 = vunpack.c.l.b16 %v483
      %v916 = vunpack.c.h.b16 %v483
      %v917 = vunpack.c.l.b16 %v484
      %v918 = vunpack.c.h.b16 %v484
      %v919 = vunpack.c.l.b16 %v485
      %v920 = vunpack.c.h.b16 %v485
      %v921 = vunpack.c.l.b16 %v486
      %v922 = vunpack.c.h.b16 %v486
      %v923 = vunpack.c.l.b16 %v487
      %v924 = vunpack.c.h.b16 %v487
      %v925 = vunpack.c.l.b16 %v488
      %v926 = vunpack.c.h.b16 %v488
      %v927 = vunpack.c.l.b16 %v489
      %v928 = vunpack.c.h.b16 %v489
      %v929 = vunpack.c.l.b16 %v490
      %v930 = vunpack.c.h.b16 %v490
      %v931 = vunpack.c.l.b16 %v491
      %v932 = vunpack.c.h.b16 %v491
      %v933 = vunpack.c.l.b16 %v492
      %v934 = vunpack.c.h.b16 %v492
      %v935 = vpack.c.b16 %v741, %v739
      %v936 = vpack.c.b16 %v742, %v740
      %v937 = vpack.c.b16 %v745, %v743
      %v938 = vpack.c.b16 %v746, %v744
      %v939 = vpack.c.b16 %v749, %v747
      %v940 = vpack.c.b16 %v750, %v748
      %v941 = vpack.c.b16 %v753, %v751
      %v942 = vpack.c.b16 %v754, %v752
      %v943 = vpack.c.b16 %v757, %v755
      %v944 = vpack.c.b16 %v758, %v756
      %v945 = vpack.c.b16 %v761, %v759
      %v946 = vpack.c.b16 %v762, %v760
      %v947 = vpack.c.b16 %v765, %v763
      %v948 = vpack.c.b16 %v766, %v764
      %v949 = vpack.c.b16 %v769, %v767
      %v950 = vpack.c.b16 %v770, %v768
      %v951 = vpack.c.b16 %v773, %v771
      %v952 = vpack.c.b16 %v774, %v772
      %v953 = vpack.c.b16 %v777, %v775
      %v954 = vpack.c.b16 %v778, %v776
      %v955 = vpack.c.b16 %v781, %v779
      %v956 = vpack.c.b16 %v782, %v780
      %v957 = vpack.c.b16 %v785, %v783
      %v958 = vpack.c.b16 %v786, %v784
      %v959 = vpack.c.b16 %v789, %v787
      %v960 = vpack.c.b16 %v790, %v788
      %v961 = vpack.c.b16 %v793, %v791
      %v962 = vpack.c.b16 %v794, %v792
      %v963 = vpack.c.b16 %v797, %v795
      %v964 = vpack.c.b16 %v798, %v796
      %v965 = vpack.c.b16 %v801, %v799
      %v966 = vpack.c.b16 %v802, %v800
      %v967 = vpack.c.b16 %v805, %v803
      %v968 = vpack.c.b16 %v806, %v804
      %v969 = vpack.c.b16 %v809, %v807
      %v970 = vpack.c.b16 %v810, %v808
      %v971 = vpack.c.b16 %v813, %v811
      %v972 = vpack.c.b16 %v814, %v812
      %v973 = vpack.c.b16 %v817, %v815
      %v974 = vpack.c.b16 %v818, %v816
      %v975 = vpack.c.b16 %v821, %v819
      %v976 = vpack.c.b16 %v822, %v820
      %v977 = vpack.c.b16 %v825, %v823
      %v978 = vpack.c.b16 %v826, %v824
      %v979 = vpack.c.b16 %v829, %v827
      %v980 = vpack.c.b16 %v830, %v828
      %v981 = vpack.c.b16 %v833, %v831
      %v982 = vpack.c.b16 %v834, %v832
      %v983 = vpack.c.b16 %v837, %v835
      %v984 = vpack.c.b16 %v838, %v836
      %v985 = vpack.c.b16 %v841, %v839
      %v986 = vpack.c.b16 %v842, %v840
      %v987 = vpack.c.b16 %v845, %v843
      %v988 = vpack.c.b16 %v846, %v844
      %v989 = vpack.c.b16 %v849, %v847
      %v990 = vpack.c.b16 %v850, %v848
      %v991 = vpack.c.b16 %v853, %v851
      %v992 = vpack.c.b16 %v854, %v852
      %v993 = vpack.c.b16 %v857, %v855
      %v994 = vpack.c.b16 %v858, %v856
      %v995 = vpack.c.b16 %v861, %v859
      %v996 = vpack.c.b16 %v862, %v860
      %v997 = vpack.c.b16 %v865, %v863
      %v998 = vpack.c.b16 %v866, %v864
      %v999 = vpack.c.b16 %v869, %v867
      %v1000 = vpack.c.b16 %v870, %v868
      %v1001 = vpack.c.b16 %v873, %v871
      %v1002 = vpack.c.b16 %v874, %v872
      %v1003 = vpack.c.b16 %v877, %v875
      %v1004 = vpack.c.b16 %v878, %v876
      %v1005 = vpack.c.b16 %v881, %v879
      %v1006 = vpack.c.b16 %v882, %v880
      %v1007 = vpack.c.b16 %v885, %v883
      %v1008 = vpack.c.b16 %v886, %v884
      %v1009 = vpack.c.b16 %v889, %v887
      %v1010 = vpack.c.b16 %v890, %v888
      %v1011 = vpack.c.b16 %v893, %v891
      %v1012 = vpack.c.b16 %v894, %v892
      %v1013 = vpack.c.b16 %v897, %v895
      %v1014 = vpack.c.b16 %v898, %v896
      %v1015 = vpack.c.b16 %v901, %v899
      %v1016 = vpack.c.b16 %v902, %v900
      %v1017 = vpack.c.b16 %v905, %v903
      %v1018 = vpack.c.b16 %v906, %v904
      %v1019 = vpack.c.b16 %v909, %v907
      %v1020 = vpack.c.b16 %v910, %v908
      %v1021 = vpack.c.b16 %v913, %v911
      %v1022 = vpack.c.b16 %v914, %v912
      %v1023 = vpack.c.b16 %v917, %v915
      %v1024 = vpack.c.b16 %v918, %v916
      %v1025 = vpack.c.b16 %v921, %v919
      %v1026 = vpack.c.b16 %v922, %v920
      %v1027 = vpack.c.b16 %v925, %v923
      %v1028 = vpack.c.b16 %v926, %v924
      %v1029 = vpack.c.b16 %v929, %v927
      %v1030 = vpack.c.b16 %v930, %v928
      %v1031 = vpack.c.b16 %v933, %v931
      %v1032 = vpack.c.b16 %v934, %v932
      %vm1131 = vcmask 130048
      %v1133 = vsel %vm1131, %v345, 0
      %v1136 = vsel %vm1131, %v352, 0
      %v1139 = vsel %vm1131, %v359, 0
      %v1142 = vsel %vm1131, %v366, 0
      %v1145 = vsel %vm1131, %v373, 0
      %v1148 = vsel %vm1131, %v380, 0
      %v1151 = vsel %vm1131, %v387, 0
      %v1154 = vsel %vm1131, %v394, 0
      %1156 = vmatprep.subr.bf16.mxu0 %v950
      %1157 = vmatpush1.bf16.msra.mxu0 %v949
      %1158 = vmatprep.subr.bf16.mxu0 %v948
      %1159 = vmatpush1.bf16.msra.mxu0 %v947
      %1160 = vmatprep.subr.bf16.mxu0 %v946
      %1161 = vmatpush1.bf16.msra.mxu0 %v945
      %1162 = vmatprep.subr.bf16.mxu0 %v944
      %1163 = vmatpush1.bf16.msra.mxu0 %v943
      %1164 = vmatprep.subr.bf16.mxu0 %v942
      %1165 = vmatpush1.bf16.msra.mxu0 %v941
      %1166 = vmatprep.subr.bf16.mxu0 %v940
      %1167 = vmatpush1.bf16.msra.mxu0 %v939
      %1168 = vmatprep.subr.bf16.mxu0 %v938
      %1169 = vmatpush1.bf16.msra.mxu0 %v937
      %1170 = vmatprep.subr.bf16.mxu0 %v936
      %1171 = vmatpush1.bf16.msra.mxu0 %v935
      %1172 = vmatprep.subr.bf16.mxu0 %v966
      %1173 = vmatpush2.bf16.msra.mxu0 %v965
      %1174 = vmatprep.subr.bf16.mxu0 %v964
      %1175 = vmatpush2.bf16.msra.mxu0 %v963
      %1176 = vmatprep.subr.bf16.mxu0 %v962
      %1177 = vmatpush2.bf16.msra.mxu0 %v961
      %1178 = vmatprep.subr.bf16.mxu0 %v960
      %1179 = vmatpush2.bf16.msra.mxu0 %v959
      %1180 = vmatprep.subr.bf16.mxu0 %v958
      %1181 = vmatpush2.bf16.msra.mxu0 %v957
      %1182 = vmatprep.subr.bf16.mxu0 %v956
      %1183 = vmatpush2.bf16.msra.mxu0 %v955
      %1184 = vmatprep.subr.bf16.mxu0 %v954
      %1185 = vmatpush2.bf16.msra.mxu0 %v953
      %1186 = vmatprep.subr.bf16.mxu0 %v952
      %1187 = vmatpush2.bf16.msra.mxu0 %v951
      %1188 = vmatprep.mubr.bf16.mxu0 %v340
      %1189 = vmatmul.mubr.bf16.gmra.mxu0 %v339
      %v1190 = vpop.f32.mrf.mxu0
      %v1191 = vadd.f32 %v609, %v1190
      %v1192 = vpop.f32.mrf.mxu0
      %v1193 = vadd.f32 %v610, %v1192
      %v1194 = vpop.f32.mrf.mxu0
      %v1195 = vadd.f32 %v611, %v1194
      %v1196 = vpop.f32.mrf.mxu0
      %v1197 = vadd.f32 %v612, %v1196
      %1198 = vmatprep.mubr.bf16.mxu0 %v347
      %1199 = vmatmul.mubr.bf16.gmra.mxu0 %v346
      %v1200 = vpop.f32.mrf.mxu0
      %v1201 = vadd.f32 %v613, %v1200
      %v1202 = vpop.f32.mrf.mxu0
      %v1203 = vadd.f32 %v614, %v1202
      %v1204 = vpop.f32.mrf.mxu0
      %v1205 = vadd.f32 %v615, %v1204
      %v1206 = vpop.f32.mrf.mxu0
      %v1207 = vadd.f32 %v616, %v1206
      %1208 = vmatprep.mubr.bf16.mxu0 %v354
      %1209 = vmatmul.mubr.bf16.gmra.mxu0 %v353
      %v1210 = vpop.f32.mrf.mxu0
      %v1211 = vadd.f32 %v617, %v1210
      %v1212 = vpop.f32.mrf.mxu0
      %v1213 = vadd.f32 %v618, %v1212
      %v1214 = vpop.f32.mrf.mxu0
      %v1215 = vadd.f32 %v619, %v1214
      %v1216 = vpop.f32.mrf.mxu0
      %v1217 = vadd.f32 %v620, %v1216
      %1218 = vmatprep.mubr.bf16.mxu0 %v361
      %1219 = vmatmul.mubr.bf16.gmra.mxu0 %v360
      %v1220 = vpop.f32.mrf.mxu0
      %v1221 = vadd.f32 %v621, %v1220
      %v1222 = vpop.f32.mrf.mxu0
      %v1223 = vadd.f32 %v622, %v1222
      %v1224 = vpop.f32.mrf.mxu0
      %v1225 = vadd.f32 %v623, %v1224
      %v1226 = vpop.f32.mrf.mxu0
      %v1227 = vadd.f32 %v624, %v1226
      %1228 = vmatprep.mubr.bf16.mxu0 %v368
      %1229 = vmatmul.mubr.bf16.gmra.mxu0 %v367
      %v1230 = vpop.f32.mrf.mxu0
      %v1231 = vadd.f32 %v625, %v1230
      %v1232 = vpop.f32.mrf.mxu0
      %v1233 = vadd.f32 %v626, %v1232
      %v1234 = vpop.f32.mrf.mxu0
      %v1235 = vadd.f32 %v627, %v1234
      %v1236 = vpop.f32.mrf.mxu0
      %v1237 = vadd.f32 %v628, %v1236
      %1238 = vmatprep.mubr.bf16.mxu0 %v375
      %1239 = vmatmul.mubr.bf16.gmra.mxu0 %v374
      %v1240 = vpop.f32.mrf.mxu0
      %v1241 = vadd.f32 %v629, %v1240
      %v1242 = vpop.f32.mrf.mxu0
      %v1243 = vadd.f32 %v630, %v1242
      %v1244 = vpop.f32.mrf.mxu0
      %v1245 = vadd.f32 %v631, %v1244
      %v1246 = vpop.f32.mrf.mxu0
      %v1247 = vadd.f32 %v632, %v1246
      %1248 = vmatprep.mubr.bf16.mxu0 %v382
      %1249 = vmatmul.mubr.bf16.gmra.mxu0 %v381
      %v1250 = vpop.f32.mrf.mxu0
      %v1251 = vadd.f32 %v633, %v1250
      %v1252 = vpop.f32.mrf.mxu0
      %v1253 = vadd.f32 %v634, %v1252
      %v1254 = vpop.f32.mrf.mxu0
      %v1255 = vadd.f32 %v635, %v1254
      %v1256 = vpop.f32.mrf.mxu0
      %v1257 = vadd.f32 %v636, %v1256
      %1258 = vmatprep.mubr.bf16.mxu0 %v389
      %1259 = vmatmul.mubr.bf16.gmra.mxu0 %v388
      %v1260 = vpop.f32.mrf.mxu0
      %v1261 = vadd.f32 %v637, %v1260
      %v1262 = vpop.f32.mrf.mxu0
      %v1263 = vadd.f32 %v638, %v1262
      %v1264 = vpop.f32.mrf.mxu0
      %v1265 = vadd.f32 %v639, %v1264
      %v1266 = vpop.f32.mrf.mxu0
      %v1267 = vadd.f32 %v640, %v1266
      %1268 = vdwg.mxu0
      %1269 = vmatprep.subr.bf16.mxu0 %v982
      %1270 = vmatpush1.bf16.msra.mxu0 %v981
      %1271 = vmatprep.subr.bf16.mxu0 %v980
      %1272 = vmatpush1.bf16.msra.mxu0 %v979
      %1273 = vmatprep.subr.bf16.mxu0 %v978
      %1274 = vmatpush1.bf16.msra.mxu0 %v977
      %1275 = vmatprep.subr.bf16.mxu0 %v976
      %1276 = vmatpush1.bf16.msra.mxu0 %v975
      %1277 = vmatprep.subr.bf16.mxu0 %v974
      %1278 = vmatpush1.bf16.msra.mxu0 %v973
      %1279 = vmatprep.subr.bf16.mxu0 %v972
      %1280 = vmatpush1.bf16.msra.mxu0 %v971
      %1281 = vmatprep.subr.bf16.mxu0 %v970
      %1282 = vmatpush1.bf16.msra.mxu0 %v969
      %1283 = vmatprep.subr.bf16.mxu0 %v968
      %1284 = vmatpush1.bf16.msra.mxu0 %v967
      %1285 = vmatprep.subr.bf16.mxu0 %v998
      %1286 = vmatpush2.bf16.msra.mxu0 %v997
      %1287 = vmatprep.subr.bf16.mxu0 %v996
      %1288 = vmatpush2.bf16.msra.mxu0 %v995
      %1289 = vmatprep.subr.bf16.mxu0 %v994
      %1290 = vmatpush2.bf16.msra.mxu0 %v993
      %1291 = vmatprep.subr.bf16.mxu0 %v992
      %1292 = vmatpush2.bf16.msra.mxu0 %v991
      %1293 = vmatprep.subr.bf16.mxu0 %v990
      %1294 = vmatpush2.bf16.msra.mxu0 %v989
      %1295 = vmatprep.subr.bf16.mxu0 %v988
      %1296 = vmatpush2.bf16.msra.mxu0 %v987
      %1297 = vmatprep.subr.bf16.mxu0 %v986
      %1298 = vmatpush2.bf16.msra.mxu0 %v985
      %1299 = vmatprep.subr.bf16.mxu0 %v984
      %1300 = vmatpush2.bf16.msra.mxu0 %v983
      %1301 = vmatprep.mubr.bf16.mxu0 %v342
      %1302 = vmatmul.mubr.bf16.gmra.mxu0 %v341
      %v1303 = vpop.f32.mrf.mxu0
      %v1304 = vadd.f32 %v1191, %v1303
      %v1305 = vpop.f32.mrf.mxu0
      %v1306 = vadd.f32 %v1193, %v1305
      %v1307 = vpop.f32.mrf.mxu0
      %v1308 = vadd.f32 %v1195, %v1307
      %v1309 = vpop.f32.mrf.mxu0
      %v1310 = vadd.f32 %v1197, %v1309
      %1311 = vmatprep.mubr.bf16.mxu0 %v349
      %1312 = vmatmul.mubr.bf16.gmra.mxu0 %v348
      %v1313 = vpop.f32.mrf.mxu0
      %v1314 = vadd.f32 %v1201, %v1313
      %v1315 = vpop.f32.mrf.mxu0
      %v1316 = vadd.f32 %v1203, %v1315
      %v1317 = vpop.f32.mrf.mxu0
      %v1318 = vadd.f32 %v1205, %v1317
      %v1319 = vpop.f32.mrf.mxu0
      %v1320 = vadd.f32 %v1207, %v1319
      %1321 = vmatprep.mubr.bf16.mxu0 %v356
      %1322 = vmatmul.mubr.bf16.gmra.mxu0 %v355
      %v1323 = vpop.f32.mrf.mxu0
      %v1324 = vadd.f32 %v1211, %v1323
      %v1325 = vpop.f32.mrf.mxu0
      %v1326 = vadd.f32 %v1213, %v1325
      %v1327 = vpop.f32.mrf.mxu0
      %v1328 = vadd.f32 %v1215, %v1327
      %v1329 = vpop.f32.mrf.mxu0
      %v1330 = vadd.f32 %v1217, %v1329
      %1331 = vmatprep.mubr.bf16.mxu0 %v363
      %1332 = vmatmul.mubr.bf16.gmra.mxu0 %v362
      %v1333 = vpop.f32.mrf.mxu0
      %v1334 = vadd.f32 %v1221, %v1333
      %v1335 = vpop.f32.mrf.mxu0
      %v1336 = vadd.f32 %v1223, %v1335
      %v1337 = vpop.f32.mrf.mxu0
      %v1338 = vadd.f32 %v1225, %v1337
      %v1339 = vpop.f32.mrf.mxu0
      %v1340 = vadd.f32 %v1227, %v1339
      %1341 = vmatprep.mubr.bf16.mxu0 %v370
      %1342 = vmatmul.mubr.bf16.gmra.mxu0 %v369
      %v1343 = vpop.f32.mrf.mxu0
      %v1344 = vadd.f32 %v1231, %v1343
      %v1345 = vpop.f32.mrf.mxu0
      %v1346 = vadd.f32 %v1233, %v1345
      %v1347 = vpop.f32.mrf.mxu0
      %v1348 = vadd.f32 %v1235, %v1347
      %v1349 = vpop.f32.mrf.mxu0
      %v1350 = vadd.f32 %v1237, %v1349
      %1351 = vmatprep.mubr.bf16.mxu0 %v377
      %1352 = vmatmul.mubr.bf16.gmra.mxu0 %v376
      %v1353 = vpop.f32.mrf.mxu0
      %v1354 = vadd.f32 %v1241, %v1353
      %v1355 = vpop.f32.mrf.mxu0
      %v1356 = vadd.f32 %v1243, %v1355
      %v1357 = vpop.f32.mrf.mxu0
      %v1358 = vadd.f32 %v1245, %v1357
      %v1359 = vpop.f32.mrf.mxu0
      %v1360 = vadd.f32 %v1247, %v1359
      %1361 = vmatprep.mubr.bf16.mxu0 %v384
      %1362 = vmatmul.mubr.bf16.gmra.mxu0 %v383
      %v1363 = vpop.f32.mrf.mxu0
      %v1364 = vadd.f32 %v1251, %v1363
      %v1365 = vpop.f32.mrf.mxu0
      %v1366 = vadd.f32 %v1253, %v1365
      %v1367 = vpop.f32.mrf.mxu0
      %v1368 = vadd.f32 %v1255, %v1367
      %v1369 = vpop.f32.mrf.mxu0
      %v1370 = vadd.f32 %v1257, %v1369
      %1371 = vmatprep.mubr.bf16.mxu0 %v391
      %1372 = vmatmul.mubr.bf16.gmra.mxu0 %v390
      %v1373 = vpop.f32.mrf.mxu0
      %v1374 = vadd.f32 %v1261, %v1373
      %v1375 = vpop.f32.mrf.mxu0
      %v1376 = vadd.f32 %v1263, %v1375
      %v1377 = vpop.f32.mrf.mxu0
      %v1378 = vadd.f32 %v1265, %v1377
      %v1379 = vpop.f32.mrf.mxu0
      %v1380 = vadd.f32 %v1267, %v1379
      %1381 = vdwg.mxu0
      %1382 = vmatprep.subr.bf16.mxu0 %v1014
      %1383 = vmatpush1.bf16.msra.mxu0 %v1013
      %1384 = vmatprep.subr.bf16.mxu0 %v1012
      %1385 = vmatpush1.bf16.msra.mxu0 %v1011
      %1386 = vmatprep.subr.bf16.mxu0 %v1010
      %1387 = vmatpush1.bf16.msra.mxu0 %v1009
      %1388 = vmatprep.subr.bf16.mxu0 %v1008
      %1389 = vmatpush1.bf16.msra.mxu0 %v1007
      %1390 = vmatprep.subr.bf16.mxu0 %v1006
      %1391 = vmatpush1.bf16.msra.mxu0 %v1005
      %1392 = vmatprep.subr.bf16.mxu0 %v1004
      %1393 = vmatpush1.bf16.msra.mxu0 %v1003
      %1394 = vmatprep.subr.bf16.mxu0 %v1002
      %1395 = vmatpush1.bf16.msra.mxu0 %v1001
      %1396 = vmatprep.subr.bf16.mxu0 %v1000
      %1397 = vmatpush1.bf16.msra.mxu0 %v999
      %1398 = vmatprep.subr.bf16.mxu0 %v1030
      %1399 = vmatpush2.bf16.msra.mxu0 %v1029
      %1400 = vmatprep.subr.bf16.mxu0 %v1028
      %1401 = vmatpush2.bf16.msra.mxu0 %v1027
      %1402 = vmatprep.subr.bf16.mxu0 %v1026
      %1403 = vmatpush2.bf16.msra.mxu0 %v1025
      %1404 = vmatprep.subr.bf16.mxu0 %v1024
      %1405 = vmatpush2.bf16.msra.mxu0 %v1023
      %1406 = vmatprep.subr.bf16.mxu0 %v1022
      %1407 = vmatpush2.bf16.msra.mxu0 %v1021
      %1408 = vmatprep.subr.bf16.mxu0 %v1020
      %1409 = vmatpush2.bf16.msra.mxu0 %v1019
      %1410 = vmatprep.subr.bf16.mxu0 %v1018
      %1411 = vmatpush2.bf16.msra.mxu0 %v1017
      %1412 = vmatprep.subr.bf16.mxu0 %v1016
      %1413 = vmatpush2.bf16.msra.mxu0 %v1015
      %1414 = vmatprep.mubr.bf16.mxu0 %v344
      %1415 = vmatmul.mubr.bf16.gmra.mxu0 %v343
      %v1416 = vpop.f32.mrf.mxu0
      %v1417 = vadd.f32 %v1304, %v1416
      %v1418 = vpop.f32.mrf.mxu0
      %v1419 = vadd.f32 %v1306, %v1418
      %v1420 = vpop.f32.mrf.mxu0
      %v1421 = vadd.f32 %v1308, %v1420
      %v1422 = vpop.f32.mrf.mxu0
      %v1423 = vadd.f32 %v1310, %v1422
      %1424 = vmatprep.mubr.bf16.mxu0 %v351
      %1425 = vmatmul.mubr.bf16.gmra.mxu0 %v350
      %v1426 = vpop.f32.mrf.mxu0
      %v1427 = vadd.f32 %v1314, %v1426
      %v1428 = vpop.f32.mrf.mxu0
      %v1429 = vadd.f32 %v1316, %v1428
      %v1430 = vpop.f32.mrf.mxu0
      %v1431 = vadd.f32 %v1318, %v1430
      %v1432 = vpop.f32.mrf.mxu0
      %v1433 = vadd.f32 %v1320, %v1432
      %1434 = vmatprep.mubr.bf16.mxu0 %v358
      %1435 = vmatmul.mubr.bf16.gmra.mxu0 %v357
      %v1436 = vpop.f32.mrf.mxu0
      %v1437 = vadd.f32 %v1324, %v1436
      %v1438 = vpop.f32.mrf.mxu0
      %v1439 = vadd.f32 %v1326, %v1438
      %v1440 = vpop.f32.mrf.mxu0
      %v1441 = vadd.f32 %v1328, %v1440
      %v1442 = vpop.f32.mrf.mxu0
      %v1443 = vadd.f32 %v1330, %v1442
      %1444 = vmatprep.mubr.bf16.mxu0 %v365
      %1445 = vmatmul.mubr.bf16.gmra.mxu0 %v364
      %v1446 = vpop.f32.mrf.mxu0
      %v1447 = vadd.f32 %v1334, %v1446
      %v1448 = vpop.f32.mrf.mxu0
      %v1449 = vadd.f32 %v1336, %v1448
      %v1450 = vpop.f32.mrf.mxu0
      %v1451 = vadd.f32 %v1338, %v1450
      %v1452 = vpop.f32.mrf.mxu0
      %v1453 = vadd.f32 %v1340, %v1452
      %1454 = vmatprep.mubr.bf16.mxu0 %v372
      %1455 = vmatmul.mubr.bf16.gmra.mxu0 %v371
      %v1456 = vpop.f32.mrf.mxu0
      %v1457 = vadd.f32 %v1344, %v1456
      %v1458 = vpop.f32.mrf.mxu0
      %v1459 = vadd.f32 %v1346, %v1458
      %v1460 = vpop.f32.mrf.mxu0
      %v1461 = vadd.f32 %v1348, %v1460
      %v1462 = vpop.f32.mrf.mxu0
      %v1463 = vadd.f32 %v1350, %v1462
      %1464 = vmatprep.mubr.bf16.mxu0 %v379
      %1465 = vmatmul.mubr.bf16.gmra.mxu0 %v378
      %v1466 = vpop.f32.mrf.mxu0
      %v1467 = vadd.f32 %v1354, %v1466
      %v1468 = vpop.f32.mrf.mxu0
      %v1469 = vadd.f32 %v1356, %v1468
      %v1470 = vpop.f32.mrf.mxu0
      %v1471 = vadd.f32 %v1358, %v1470
      %v1472 = vpop.f32.mrf.mxu0
      %v1473 = vadd.f32 %v1360, %v1472
      %1474 = vmatprep.mubr.bf16.mxu0 %v386
      %1475 = vmatmul.mubr.bf16.gmra.mxu0 %v385
      %v1476 = vpop.f32.mrf.mxu0
      %v1477 = vadd.f32 %v1364, %v1476
      %v1478 = vpop.f32.mrf.mxu0
      %v1479 = vadd.f32 %v1366, %v1478
      %v1480 = vpop.f32.mrf.mxu0
      %v1481 = vadd.f32 %v1368, %v1480
      %v1482 = vpop.f32.mrf.mxu0
      %v1483 = vadd.f32 %v1370, %v1482
      %1484 = vmatprep.mubr.bf16.mxu0 %v393
      %1485 = vmatmul.mubr.bf16.gmra.mxu0 %v392
      %v1486 = vpop.f32.mrf.mxu0
      %v1487 = vadd.f32 %v1374, %v1486
      %v1488 = vpop.f32.mrf.mxu0
      %v1489 = vadd.f32 %v1376, %v1488
      %v1490 = vpop.f32.mrf.mxu0
      %v1491 = vadd.f32 %v1378, %v1490
      %v1492 = vpop.f32.mrf.mxu0
      %v1493 = vadd.f32 %v1380, %v1492
      %1494 = vdwg.mxu0
      %1495 = vmatprep.subr.bf16.mxu0 0
      %1496 = vmatpush1.bf16.msra.mxu0 0
      %1497 = vmatprep.subr.bf16.mxu0 0
      %1498 = vmatpush1.bf16.msra.mxu0 0
      %1499 = vmatprep.subr.bf16.mxu0 0
      %1500 = vmatpush1.bf16.msra.mxu0 0
      %1501 = vmatprep.subr.bf16.mxu0 0
      %1502 = vmatpush1.bf16.msra.mxu0 0
      %1503 = vmatprep.subr.bf16.mxu0 0
      %1504 = vmatpush1.bf16.msra.mxu0 0
      %1505 = vmatprep.subr.bf16.mxu0 0
      %1506 = vmatpush1.bf16.msra.mxu0 0
      %1507 = vmatprep.subr.bf16.mxu0 0
      %1508 = vmatpush1.bf16.msra.mxu0 0
      %1509 = vmatprep.subr.bf16.mxu0 %v1032
      %1510 = vmatpush1.bf16.msra.mxu0 %v1031
      %1511 = vmatprep.subr.bf16.mxu0 0
      %1512 = vmatpush2.bf16.msra.mxu0 0
      %1513 = vmatprep.subr.bf16.mxu0 0
      %1514 = vmatpush2.bf16.msra.mxu0 0
      %1515 = vmatprep.subr.bf16.mxu0 0
      %1516 = vmatpush2.bf16.msra.mxu0 0
      %1517 = vmatprep.subr.bf16.mxu0 0
      %1518 = vmatpush2.bf16.msra.mxu0 0
      %1519 = vmatprep.subr.bf16.mxu0 0
      %1520 = vmatpush2.bf16.msra.mxu0 0
      %1521 = vmatprep.subr.bf16.mxu0 0
      %1522 = vmatpush2.bf16.msra.mxu0 0
      %1523 = vmatprep.subr.bf16.mxu0 0
      %1524 = vmatpush2.bf16.msra.mxu0 0
      %1525 = vmatprep.subr.bf16.mxu0 0
      %1526 = vmatpush2.bf16.msra.mxu0 0
      %1527 = vmatprep.mubr.bf16.mxu0 0
      %1528 = vmatmul.mubr.bf16.gmra.mxu0 %v1133
      %v1529 = vpop.f32.mrf.mxu0
      %v1530 = vadd.f32 %v1417, %v1529
      %v1531 = vpop.f32.mrf.mxu0
      %v1532 = vadd.f32 %v1419, %v1531
      %v1533 = vpop.f32.mrf.mxu0
      %v1534 = vadd.f32 %v1421, %v1533
      %v1535 = vpop.f32.mrf.mxu0
      %v1536 = vadd.f32 %v1423, %v1535
      %1537 = vmatprep.mubr.bf16.mxu0 0
      %1538 = vmatmul.mubr.bf16.gmra.mxu0 %v1136
      %v1539 = vpop.f32.mrf.mxu0
      %v1540 = vadd.f32 %v1427, %v1539
      %v1541 = vpop.f32.mrf.mxu0
      %v1542 = vadd.f32 %v1429, %v1541
      %v1543 = vpop.f32.mrf.mxu0
      %v1544 = vadd.f32 %v1431, %v1543
      %v1545 = vpop.f32.mrf.mxu0
      %v1546 = vadd.f32 %v1433, %v1545
      %1547 = vmatprep.mubr.bf16.mxu0 0
      %1548 = vmatmul.mubr.bf16.gmra.mxu0 %v1139
      %v1549 = vpop.f32.mrf.mxu0
      %v1550 = vadd.f32 %v1437, %v1549
      %v1551 = vpop.f32.mrf.mxu0
      %v1552 = vadd.f32 %v1439, %v1551
      %v1553 = vpop.f32.mrf.mxu0
      %v1554 = vadd.f32 %v1441, %v1553
      %v1555 = vpop.f32.mrf.mxu0
      %v1556 = vadd.f32 %v1443, %v1555
      %1557 = vmatprep.mubr.bf16.mxu0 0
      %1558 = vmatmul.mubr.bf16.gmra.mxu0 %v1142
      %v1559 = vpop.f32.mrf.mxu0
      %v1560 = vadd.f32 %v1447, %v1559
      %v1561 = vpop.f32.mrf.mxu0
      %v1562 = vadd.f32 %v1449, %v1561
      %v1563 = vpop.f32.mrf.mxu0
      %v1564 = vadd.f32 %v1451, %v1563
      %v1565 = vpop.f32.mrf.mxu0
      %v1566 = vadd.f32 %v1453, %v1565
      %1567 = vmatprep.mubr.bf16.mxu0 0
      %1568 = vmatmul.mubr.bf16.gmra.mxu0 %v1145
      %v1569 = vpop.f32.mrf.mxu0
      %v1570 = vadd.f32 %v1457, %v1569
      %v1571 = vpop.f32.mrf.mxu0
      %v1572 = vadd.f32 %v1459, %v1571
      %v1573 = vpop.f32.mrf.mxu0
      %v1574 = vadd.f32 %v1461, %v1573
      %v1575 = vpop.f32.mrf.mxu0
      %v1576 = vadd.f32 %v1463, %v1575
      %1577 = vmatprep.mubr.bf16.mxu0 0
      %1578 = vmatmul.mubr.bf16.gmra.mxu0 %v1148
      %v1579 = vpop.f32.mrf.mxu0
      %v1580 = vadd.f32 %v1467, %v1579
      %v1581 = vpop.f32.mrf.mxu0
      %v1582 = vadd.f32 %v1469, %v1581
      %v1583 = vpop.f32.mrf.mxu0
      %v1584 = vadd.f32 %v1471, %v1583
      %v1585 = vpop.f32.mrf.mxu0
      %v1586 = vadd.f32 %v1473, %v1585
      %1587 = vmatprep.mubr.bf16.mxu0 0
      %1588 = vmatmul.mubr.bf16.gmra.mxu0 %v1151
      %v1589 = vpop.f32.mrf.mxu0
      %v1590 = vadd.f32 %v1477, %v1589
      %v1591 = vpop.f32.mrf.mxu0
      %v1592 = vadd.f32 %v1479, %v1591
      %v1593 = vpop.f32.mrf.mxu0
      %v1594 = vadd.f32 %v1481, %v1593
      %v1595 = vpop.f32.mrf.mxu0
      %v1596 = vadd.f32 %v1483, %v1595
      %1597 = vmatprep.mubr.bf16.mxu0 0
      %1598 = vmatmul.mubr.bf16.gmra.mxu0 %v1154
      %v1599 = vpop.f32.mrf.mxu0
      %v1600 = vadd.f32 %v1487, %v1599
      %v1601 = vpop.f32.mrf.mxu0
      %v1602 = vadd.f32 %v1489, %v1601
      %v1603 = vpop.f32.mrf.mxu0
      %v1604 = vadd.f32 %v1491, %v1603
      %v1605 = vpop.f32.mrf.mxu0
      %v1606 = vadd.f32 %v1493, %v1605
      %1607 = vdwg.mxu0
      %v1608 = vlaneseq
      %v1609 = vshrl.u32 %v1608, 7
      %v1610 = vsub.s32 0, %v1609
      %v1611 = vrot.slane %v493, %v1610
      %v1612 = vlaneseq
      %v1613 = vshrl.u32 %v1612, 7
      %v1614 = vsub.s32 4, %v1613
      %v1615 = vrot.slane %v493, %v1614
      %v1618 = vlaneseq
      %v1619 = vshrl.u32 %v1618, 7
      %v1620 = vsub.s32 0, %v1619
      %v1621 = vrot.slane %v1611, %v1620
      %v1622 = vlaneseq
      %v1623 = vshrl.u32 %v1622, 7
      %v1624 = vsub.s32 0, %v1623
      %v1625 = vrot.slane %v1615, %v1624
      %v1626 = vadd.f32 %v1530, %v1621
      %v1627 = vadd.f32 %v1532, %v1625
      %v1628 = vadd.f32 %v1534, %v1621
      %v1629 = vadd.f32 %v1536, %v1625
      %v1630 = vadd.f32 %v1540, %v1621
      %v1631 = vadd.f32 %v1542, %v1625
      %v1632 = vadd.f32 %v1544, %v1621
      %v1633 = vadd.f32 %v1546, %v1625
      %v1634 = vadd.f32 %v1550, %v1621
      %v1635 = vadd.f32 %v1552, %v1625
      %v1636 = vadd.f32 %v1554, %v1621
      %v1637 = vadd.f32 %v1556, %v1625
      %v1638 = vadd.f32 %v1560, %v1621
      %v1639 = vadd.f32 %v1562, %v1625
      %v1640 = vadd.f32 %v1564, %v1621
      %v1641 = vadd.f32 %v1566, %v1625
      %v1642 = vadd.f32 %v1570, %v1621
      %v1643 = vadd.f32 %v1572, %v1625
      %v1644 = vadd.f32 %v1574, %v1621
      %v1645 = vadd.f32 %v1576, %v1625
      %v1646 = vadd.f32 %v1580, %v1621
      %v1647 = vadd.f32 %v1582, %v1625
      %v1648 = vadd.f32 %v1584, %v1621
      %v1649 = vadd.f32 %v1586, %v1625
      %v1650 = vadd.f32 %v1590, %v1621
      %v1651 = vadd.f32 %v1592, %v1625
      %v1652 = vadd.f32 %v1594, %v1621
      %v1653 = vadd.f32 %v1596, %v1625
      %v1654 = vadd.f32 %v1600, %v1621
      %v1655 = vadd.f32 %v1602, %v1625
      %v1656 = vadd.f32 %v1604, %v1621
      %v1657 = vadd.f32 %v1606, %v1625
      %vm1658 = vcmp.ge.f32.partialorder %v1626, 0.0
      %vm1659 = vcmp.ge.f32.partialorder %v1627, 0.0
      %vm1660 = vcmp.ge.f32.partialorder %v1628, 0.0
      %vm1661 = vcmp.ge.f32.partialorder %v1629, 0.0
      %vm1662 = vcmp.ge.f32.partialorder %v1630, 0.0
      %vm1663 = vcmp.ge.f32.partialorder %v1631, 0.0
      %vm1664 = vcmp.ge.f32.partialorder %v1632, 0.0
      %vm1665 = vcmp.ge.f32.partialorder %v1633, 0.0
      %vm1666 = vcmp.ge.f32.partialorder %v1634, 0.0
      %vm1667 = vcmp.ge.f32.partialorder %v1635, 0.0
      %vm1668 = vcmp.ge.f32.partialorder %v1636, 0.0
      %vm1669 = vcmp.ge.f32.partialorder %v1637, 0.0
      %vm1670 = vcmp.ge.f32.partialorder %v1638, 0.0
      %vm1671 = vcmp.ge.f32.partialorder %v1639, 0.0
      %vm1672 = vcmp.ge.f32.partialorder %v1640, 0.0
      %vm1673 = vcmp.ge.f32.partialorder %v1641, 0.0
      %vm1674 = vcmp.ge.f32.partialorder %v1642, 0.0
      %vm1675 = vcmp.ge.f32.partialorder %v1643, 0.0
      %vm1676 = vcmp.ge.f32.partialorder %v1644, 0.0
      %vm1677 = vcmp.ge.f32.partialorder %v1645, 0.0
      %vm1678 = vcmp.ge.f32.partialorder %v1646, 0.0
      %vm1679 = vcmp.ge.f32.partialorder %v1647, 0.0
      %vm1680 = vcmp.ge.f32.partialorder %v1648, 0.0
      %vm1681 = vcmp.ge.f32.partialorder %v1649, 0.0
      %vm1682 = vcmp.ge.f32.partialorder %v1650, 0.0
      %vm1683 = vcmp.ge.f32.partialorder %v1651, 0.0
      %vm1684 = vcmp.ge.f32.partialorder %v1652, 0.0
      %vm1685 = vcmp.ge.f32.partialorder %v1653, 0.0
      %vm1686 = vcmp.ge.f32.partialorder %v1654, 0.0
      %vm1687 = vcmp.ge.f32.partialorder %v1655, 0.0
      %vm1688 = vcmp.ge.f32.partialorder %v1656, 0.0
      %vm1689 = vcmp.ge.f32.partialorder %v1657, 0.0
      %v1690 = vmul.f32 %v1626, 0.02
      %v1691 = vmul.f32 %v1627, 0.02
      %v1692 = vmul.f32 %v1628, 0.02
      %v1693 = vmul.f32 %v1629, 0.02
      %v1694 = vmul.f32 %v1630, 0.02
      %v1695 = vmul.f32 %v1631, 0.02
      %v1696 = vmul.f32 %v1632, 0.02
      %v1697 = vmul.f32 %v1633, 0.02
      %v1698 = vmul.f32 %v1634, 0.02
      %v1699 = vmul.f32 %v1635, 0.02
      %v1700 = vmul.f32 %v1636, 0.02
      %v1701 = vmul.f32 %v1637, 0.02
      %v1702 = vmul.f32 %v1638, 0.02
      %v1703 = vmul.f32 %v1639, 0.02
      %v1704 = vmul.f32 %v1640, 0.02
      %v1705 = vmul.f32 %v1641, 0.02
      %v1706 = vmul.f32 %v1642, 0.02
      %v1707 = vmul.f32 %v1643, 0.02
      %v1708 = vmul.f32 %v1644, 0.02
      %v1709 = vmul.f32 %v1645, 0.02
      %v1710 = vmul.f32 %v1646, 0.02
      %v1711 = vmul.f32 %v1647, 0.02
      %v1712 = vmul.f32 %v1648, 0.02
      %v1713 = vmul.f32 %v1649, 0.02
      %v1714 = vmul.f32 %v1650, 0.02
      %v1715 = vmul.f32 %v1651, 0.02
      %v1716 = vmul.f32 %v1652, 0.02
      %v1717 = vmul.f32 %v1653, 0.02
      %v1718 = vmul.f32 %v1654, 0.02
      %v1719 = vmul.f32 %v1655, 0.02
      %v1720 = vmul.f32 %v1656, 0.02
      %v1721 = vmul.f32 %v1657, 0.02
      %v1722 = vsel %vm1658, %v1626, %v1690
      %v1723 = vsel %vm1659, %v1627, %v1691
      %v1724 = vsel %vm1660, %v1628, %v1692
      %v1725 = vsel %vm1661, %v1629, %v1693
      %v1726 = vsel %vm1662, %v1630, %v1694
      %v1727 = vsel %vm1663, %v1631, %v1695
      %v1728 = vsel %vm1664, %v1632, %v1696
      %v1729 = vsel %vm1665, %v1633, %v1697
      %v1730 = vsel %vm1666, %v1634, %v1698
      %v1731 = vsel %vm1667, %v1635, %v1699
      %v1732 = vsel %vm1668, %v1636, %v1700
      %v1733 = vsel %vm1669, %v1637, %v1701
      %v1734 = vsel %vm1670, %v1638, %v1702
      %v1735 = vsel %vm1671, %v1639, %v1703
      %v1736 = vsel %vm1672, %v1640, %v1704
      %v1737 = vsel %vm1673, %v1641, %v1705
      %v1738 = vsel %vm1674, %v1642, %v1706
      %v1739 = vsel %vm1675, %v1643, %v1707
      %v1740 = vsel %vm1676, %v1644, %v1708
      %v1741 = vsel %vm1677, %v1645, %v1709
      %v1742 = vsel %vm1678, %v1646, %v1710
      %v1743 = vsel %vm1679, %v1647, %v1711
      %v1744 = vsel %vm1680, %v1648, %v1712
      %v1745 = vsel %vm1681, %v1649, %v1713
      %v1746 = vsel %vm1682, %v1650, %v1714
      %v1747 = vsel %vm1683, %v1651, %v1715
      %v1748 = vsel %vm1684, %v1652, %v1716
      %v1749 = vsel %vm1685, %v1653, %v1717
      %v1750 = vsel %vm1686, %v1654, %v1718
      %v1751 = vsel %vm1687, %v1655, %v1719
      %v1752 = vsel %vm1688, %v1656, %v1720
      %v1753 = vsel %vm1689, %v1657, %v1721
      %v1754 = vlaneseq
      %v1755 = vand.u32 %v1754, 127
      %v1756 = vadd.s32 %v1755, 128
      %vm1757 = vcmp.lt.s32.totalorder %v1755, 200
      %vm1758 = vcmp.lt.s32.totalorder %v1756, 200
      %v1759 = vsel %vm1757, 1, 0
      %v1760 = vsel %vm1758, 1, 0
      %v1761 = vcvt.s32.f32 %v1759
      %v1762 = vcvt.s32.f32 %v1760
      %v1763 = vadd.f32 %v1722, %v1723
      %1764 = vadd.xlane.f32.xlu0 %v1763
      %v1765 = vpop.xlane.xlu0 %1764
      %v1766 = vadd.f32 %v1724, %v1725
      %1767 = vadd.xlane.f32.xlu0 %v1766
      %v1768 = vpop.xlane.xlu0 %1767
      %v1769 = vadd.f32 %v1726, %v1727
      %1770 = vadd.xlane.f32.xlu0 %v1769
      %v1771 = vpop.xlane.xlu0 %1770
      %v1772 = vadd.f32 %v1728, %v1729
      %1773 = vadd.xlane.f32.xlu0 %v1772
      %v1774 = vpop.xlane.xlu0 %1773
      %v1775 = vadd.f32 %v1730, %v1731
      %1776 = vadd.xlane.f32.xlu0 %v1775
      %v1777 = vpop.xlane.xlu0 %1776
      %v1778 = vadd.f32 %v1732, %v1733
      %1779 = vadd.xlane.f32.xlu0 %v1778
      %v1780 = vpop.xlane.xlu0 %1779
      %v1781 = vadd.f32 %v1734, %v1735
      %1782 = vadd.xlane.f32.xlu0 %v1781
      %v1783 = vpop.xlane.xlu0 %1782
      %v1784 = vadd.f32 %v1736, %v1737
      %1785 = vadd.xlane.f32.xlu0 %v1784
      %v1786 = vpop.xlane.xlu0 %1785
      %v1787 = vadd.f32 %v1738, %v1739
      %1788 = vadd.xlane.f32.xlu0 %v1787
      %v1789 = vpop.xlane.xlu0 %1788
      %v1790 = vadd.f32 %v1740, %v1741
      %1791 = vadd.xlane.f32.xlu0 %v1790
      %v1792 = vpop.xlane.xlu0 %1791
      %v1793 = vadd.f32 %v1742, %v1743
      %1794 = vadd.xlane.f32.xlu0 %v1793
      %v1795 = vpop.xlane.xlu0 %1794
      %v1796 = vadd.f32 %v1744, %v1745
      %1797 = vadd.xlane.f32.xlu0 %v1796
      %v1798 = vpop.xlane.xlu0 %1797
      %v1799 = vadd.f32 %v1746, %v1747
      %1800 = vadd.xlane.f32.xlu0 %v1799
      %v1801 = vpop.xlane.xlu0 %1800
      %v1802 = vadd.f32 %v1748, %v1749
      %1803 = vadd.xlane.f32.xlu0 %v1802
      %v1804 = vpop.xlane.xlu0 %1803
      %v1805 = vadd.f32 %v1750, %v1751
      %1806 = vadd.xlane.f32.xlu0 %v1805
      %v1807 = vpop.xlane.xlu0 %1806
      %v1808 = vadd.f32 %v1752, %v1753
      %1809 = vadd.xlane.f32.xlu0 %v1808
      %v1810 = vpop.xlane.xlu0 %1809
      %v1811 = vmul.f32 %v1765, 0.005
      %v1812 = vmul.f32 %v1768, 0.005
      %v1813 = vmul.f32 %v1771, 0.005
      %v1814 = vmul.f32 %v1774, 0.005
      %v1815 = vmul.f32 %v1777, 0.005
      %v1816 = vmul.f32 %v1780, 0.005
      %v1817 = vmul.f32 %v1783, 0.005
      %v1818 = vmul.f32 %v1786, 0.005
      %v1819 = vmul.f32 %v1789, 0.005
      %v1820 = vmul.f32 %v1792, 0.005
      %v1821 = vmul.f32 %v1795, 0.005
      %v1822 = vmul.f32 %v1798, 0.005
      %v1823 = vmul.f32 %v1801, 0.005
      %v1824 = vmul.f32 %v1804, 0.005
      %v1825 = vmul.f32 %v1807, 0.005
      %v1826 = vmul.f32 %v1810, 0.005
      %v1827 = vsub.f32 %v1722, %v1811
      %v1828 = vsub.f32 %v1723, %v1811
      %v1829 = vsub.f32 %v1724, %v1812
      %v1830 = vsub.f32 %v1725, %v1812
      %v1831 = vsub.f32 %v1726, %v1813
      %v1832 = vsub.f32 %v1727, %v1813
      %v1833 = vsub.f32 %v1728, %v1814
      %v1834 = vsub.f32 %v1729, %v1814
      %v1835 = vsub.f32 %v1730, %v1815
      %v1836 = vsub.f32 %v1731, %v1815
      %v1837 = vsub.f32 %v1732, %v1816
      %v1838 = vsub.f32 %v1733, %v1816
      %v1839 = vsub.f32 %v1734, %v1817
      %v1840 = vsub.f32 %v1735, %v1817
      %v1841 = vsub.f32 %v1736, %v1818
      %v1842 = vsub.f32 %v1737, %v1818
      %v1843 = vsub.f32 %v1738, %v1819
      %v1844 = vsub.f32 %v1739, %v1819
      %v1845 = vsub.f32 %v1740, %v1820
      %v1846 = vsub.f32 %v1741, %v1820
      %v1847 = vsub.f32 %v1742, %v1821
      %v1848 = vsub.f32 %v1743, %v1821
      %v1849 = vsub.f32 %v1744, %v1822
      %v1850 = vsub.f32 %v1745, %v1822
      %v1851 = vsub.f32 %v1746, %v1823
      %v1852 = vsub.f32 %v1747, %v1823
      %v1853 = vsub.f32 %v1748, %v1824
      %v1854 = vsub.f32 %v1749, %v1824
      %v1855 = vsub.f32 %v1750, %v1825
      %v1856 = vsub.f32 %v1751, %v1825
      %v1857 = vsub.f32 %v1752, %v1826
      %v1858 = vsub.f32 %v1753, %v1826
      %v1859 = vmul.f32 %v1827, %v1761
      %v1860 = vmul.f32 %v1828, %v1762
      %v1861 = vmul.f32 %v1829, %v1761
      %v1862 = vmul.f32 %v1830, %v1762
      %v1863 = vmul.f32 %v1831, %v1761
      %v1864 = vmul.f32 %v1832, %v1762
      %v1865 = vmul.f32 %v1833, %v1761
      %v1866 = vmul.f32 %v1834, %v1762
      %v1867 = vmul.f32 %v1835, %v1761
      %v1868 = vmul.f32 %v1836, %v1762
      %v1869 = vmul.f32 %v1837, %v1761
      %v1870 = vmul.f32 %v1838, %v1762
      %v1871 = vmul.f32 %v1839, %v1761
      %v1872 = vmul.f32 %v1840, %v1762
      %v1873 = vmul.f32 %v1841, %v1761
      %v1874 = vmul.f32 %v1842, %v1762
      %v1875 = vmul.f32 %v1843, %v1761
      %v1876 = vmul.f32 %v1844, %v1762
      %v1877 = vmul.f32 %v1845, %v1761
      %v1878 = vmul.f32 %v1846, %v1762
      %v1879 = vmul.f32 %v1847, %v1761
      %v1880 = vmul.f32 %v1848, %v1762
      %v1881 = vmul.f32 %v1849, %v1761
      %v1882 = vmul.f32 %v1850, %v1762
      %v1883 = vmul.f32 %v1851, %v1761
      %v1884 = vmul.f32 %v1852, %v1762
      %v1885 = vmul.f32 %v1853, %v1761
      %v1886 = vmul.f32 %v1854, %v1762
      %v1887 = vmul.f32 %v1855, %v1761
      %v1888 = vmul.f32 %v1856, %v1762
      %v1889 = vmul.f32 %v1857, %v1761
      %v1890 = vmul.f32 %v1858, %v1762
      %v1891 = vmul.f32 %v1859, %v1859
      %v1892 = vmul.f32 %v1860, %v1860
      %v1893 = vmul.f32 %v1861, %v1861
      %v1894 = vmul.f32 %v1862, %v1862
      %v1895 = vmul.f32 %v1863, %v1863
      %v1896 = vmul.f32 %v1864, %v1864
      %v1897 = vmul.f32 %v1865, %v1865
      %v1898 = vmul.f32 %v1866, %v1866
      %v1899 = vmul.f32 %v1867, %v1867
      %v1900 = vmul.f32 %v1868, %v1868
      %v1901 = vmul.f32 %v1869, %v1869
      %v1902 = vmul.f32 %v1870, %v1870
      %v1903 = vmul.f32 %v1871, %v1871
      %v1904 = vmul.f32 %v1872, %v1872
      %v1905 = vmul.f32 %v1873, %v1873
      %v1906 = vmul.f32 %v1874, %v1874
      %v1907 = vmul.f32 %v1875, %v1875
      %v1908 = vmul.f32 %v1876, %v1876
      %v1909 = vmul.f32 %v1877, %v1877
      %v1910 = vmul.f32 %v1878, %v1878
      %v1911 = vmul.f32 %v1879, %v1879
      %v1912 = vmul.f32 %v1880, %v1880
      %v1913 = vmul.f32 %v1881, %v1881
      %v1914 = vmul.f32 %v1882, %v1882
      %v1915 = vmul.f32 %v1883, %v1883
      %v1916 = vmul.f32 %v1884, %v1884
      %v1917 = vmul.f32 %v1885, %v1885
      %v1918 = vmul.f32 %v1886, %v1886
      %v1919 = vmul.f32 %v1887, %v1887
      %v1920 = vmul.f32 %v1888, %v1888
      %v1921 = vmul.f32 %v1889, %v1889
      %v1922 = vmul.f32 %v1890, %v1890
      %v1923 = vadd.f32 %v1891, %v1892
      %1924 = vadd.xlane.f32.xlu0 %v1923
      %v1925 = vpop.xlane.xlu0 %1924
      %v1926 = vadd.f32 %v1893, %v1894
      %1927 = vadd.xlane.f32.xlu0 %v1926
      %v1928 = vpop.xlane.xlu0 %1927
      %v1929 = vadd.f32 %v1895, %v1896
      %1930 = vadd.xlane.f32.xlu0 %v1929
      %v1931 = vpop.xlane.xlu0 %1930
      %v1932 = vadd.f32 %v1897, %v1898
      %1933 = vadd.xlane.f32.xlu0 %v1932
      %v1934 = vpop.xlane.xlu0 %1933
      %v1935 = vadd.f32 %v1899, %v1900
      %1936 = vadd.xlane.f32.xlu0 %v1935
      %v1937 = vpop.xlane.xlu0 %1936
      %v1938 = vadd.f32 %v1901, %v1902
      %1939 = vadd.xlane.f32.xlu0 %v1938
      %v1940 = vpop.xlane.xlu0 %1939
      %v1941 = vadd.f32 %v1903, %v1904
      %1942 = vadd.xlane.f32.xlu0 %v1941
      %v1943 = vpop.xlane.xlu0 %1942
      %v1944 = vadd.f32 %v1905, %v1906
      %1945 = vadd.xlane.f32.xlu0 %v1944
      %v1946 = vpop.xlane.xlu0 %1945
      %v1947 = vadd.f32 %v1907, %v1908
      %1948 = vadd.xlane.f32.xlu0 %v1947
      %v1949 = vpop.xlane.xlu0 %1948
      %v1950 = vadd.f32 %v1909, %v1910
      %1951 = vadd.xlane.f32.xlu0 %v1950
      %v1952 = vpop.xlane.xlu0 %1951
      %v1953 = vadd.f32 %v1911, %v1912
      %1954 = vadd.xlane.f32.xlu0 %v1953
      %v1955 = vpop.xlane.xlu0 %1954
      %v1956 = vadd.f32 %v1913, %v1914
      %1957 = vadd.xlane.f32.xlu0 %v1956
      %v1958 = vpop.xlane.xlu0 %1957
      %v1959 = vadd.f32 %v1915, %v1916
      %1960 = vadd.xlane.f32.xlu0 %v1959
      %v1961 = vpop.xlane.xlu0 %1960
      %v1962 = vadd.f32 %v1917, %v1918
      %1963 = vadd.xlane.f32.xlu0 %v1962
      %v1964 = vpop.xlane.xlu0 %1963
      %v1965 = vadd.f32 %v1919, %v1920
      %1966 = vadd.xlane.f32.xlu0 %v1965
      %v1967 = vpop.xlane.xlu0 %1966
      %v1968 = vadd.f32 %v1921, %v1922
      %1969 = vadd.xlane.f32.xlu0 %v1968
      %v1970 = vpop.xlane.xlu0 %1969
      %v1971 = vmul.f32 %v1925, 0.005
      %v1972 = vmul.f32 %v1928, 0.005
      %v1973 = vmul.f32 %v1931, 0.005
      %v1974 = vmul.f32 %v1934, 0.005
      %v1975 = vmul.f32 %v1937, 0.005
      %v1976 = vmul.f32 %v1940, 0.005
      %v1977 = vmul.f32 %v1943, 0.005
      %v1978 = vmul.f32 %v1946, 0.005
      %v1979 = vmul.f32 %v1949, 0.005
      %v1980 = vmul.f32 %v1952, 0.005
      %v1981 = vmul.f32 %v1955, 0.005
      %v1982 = vmul.f32 %v1958, 0.005
      %v1983 = vmul.f32 %v1961, 0.005
      %v1984 = vmul.f32 %v1964, 0.005
      %v1985 = vmul.f32 %v1967, 0.005
      %v1986 = vmul.f32 %v1970, 0.005
      %v1987 = vlaneseq
      %v1988 = vshrl.u32 %v1987, 7
      %v1989 = vsub.s32 2, %v1988
      %v1990 = vrot.slane %v493, %v1989
      %v1991 = vlaneseq
      %v1992 = vshrl.u32 %v1991, 7
      %v1993 = vsub.s32 6, %v1992
      %v1994 = vrot.slane %v493, %v1993
      %v1997 = vlaneseq
      %v1998 = vshrl.u32 %v1997, 7
      %v1999 = vsub.s32 2, %v1998
      %v2000 = vrot.slane %v1990, %v1999
      %v2001 = vlaneseq
      %v2002 = vshrl.u32 %v2001, 7
      %v2003 = vsub.s32 2, %v2002
      %v2004 = vrot.slane %v1994, %v2003
      %v2005 = vmul.f32 %v1859, %v2000
      %v2006 = vmul.f32 %v1860, %v2004
      %v2007 = vmul.f32 %v1861, %v2000
      %v2008 = vmul.f32 %v1862, %v2004
      %v2009 = vmul.f32 %v1863, %v2000
      %v2010 = vmul.f32 %v1864, %v2004
      %v2011 = vmul.f32 %v1865, %v2000
      %v2012 = vmul.f32 %v1866, %v2004
      %v2013 = vmul.f32 %v1867, %v2000
      %v2014 = vmul.f32 %v1868, %v2004
      %v2015 = vmul.f32 %v1869, %v2000
      %v2016 = vmul.f32 %v1870, %v2004
      %v2017 = vmul.f32 %v1871, %v2000
      %v2018 = vmul.f32 %v1872, %v2004
      %v2019 = vmul.f32 %v1873, %v2000
      %v2020 = vmul.f32 %v1874, %v2004
      %v2021 = vmul.f32 %v1875, %v2000
      %v2022 = vmul.f32 %v1876, %v2004
      %v2023 = vmul.f32 %v1877, %v2000
      %v2024 = vmul.f32 %v1878, %v2004
      %v2025 = vmul.f32 %v1879, %v2000
      %v2026 = vmul.f32 %v1880, %v2004
      %v2027 = vmul.f32 %v1881, %v2000
      %v2028 = vmul.f32 %v1882, %v2004
      %v2029 = vmul.f32 %v1883, %v2000
      %v2030 = vmul.f32 %v1884, %v2004
      %v2031 = vmul.f32 %v1885, %v2000
      %v2032 = vmul.f32 %v1886, %v2004
      %v2033 = vmul.f32 %v1887, %v2000
      %v2034 = vmul.f32 %v1888, %v2004
      %v2035 = vmul.f32 %v1889, %v2000
      %v2036 = vmul.f32 %v1890, %v2004
      %v2037 = vadd.f32 %v2005, %v2006
      %2038 = vadd.xlane.f32.xlu0 %v2037
      %v2039 = vpop.xlane.xlu0 %2038
      %v2040 = vadd.f32 %v2007, %v2008
      %2041 = vadd.xlane.f32.xlu0 %v2040
      %v2042 = vpop.xlane.xlu0 %2041
      %v2043 = vadd.f32 %v2009, %v2010
      %2044 = vadd.xlane.f32.xlu0 %v2043
      %v2045 = vpop.xlane.xlu0 %2044
      %v2046 = vadd.f32 %v2011, %v2012
      %2047 = vadd.xlane.f32.xlu0 %v2046
      %v2048 = vpop.xlane.xlu0 %2047
      %v2049 = vadd.f32 %v2013, %v2014
      %2050 = vadd.xlane.f32.xlu0 %v2049
      %v2051 = vpop.xlane.xlu0 %2050
      %v2052 = vadd.f32 %v2015, %v2016
      %2053 = vadd.xlane.f32.xlu0 %v2052
      %v2054 = vpop.xlane.xlu0 %2053
      %v2055 = vadd.f32 %v2017, %v2018
      %2056 = vadd.xlane.f32.xlu0 %v2055
      %v2057 = vpop.xlane.xlu0 %2056
      %v2058 = vadd.f32 %v2019, %v2020
      %2059 = vadd.xlane.f32.xlu0 %v2058
      %v2060 = vpop.xlane.xlu0 %2059
      %v2061 = vadd.f32 %v2021, %v2022
      %2062 = vadd.xlane.f32.xlu0 %v2061
      %v2063 = vpop.xlane.xlu0 %2062
      %v2064 = vadd.f32 %v2023, %v2024
      %2065 = vadd.xlane.f32.xlu0 %v2064
      %v2066 = vpop.xlane.xlu0 %2065
      %v2067 = vadd.f32 %v2025, %v2026
      %2068 = vadd.xlane.f32.xlu0 %v2067
      %v2069 = vpop.xlane.xlu0 %2068
      %v2070 = vadd.f32 %v2027, %v2028
      %2071 = vadd.xlane.f32.xlu0 %v2070
      %v2072 = vpop.xlane.xlu0 %2071
      %v2073 = vadd.f32 %v2029, %v2030
      %2074 = vadd.xlane.f32.xlu0 %v2073
      %v2075 = vpop.xlane.xlu0 %2074
      %v2076 = vadd.f32 %v2031, %v2032
      %2077 = vadd.xlane.f32.xlu0 %v2076
      %v2078 = vpop.xlane.xlu0 %2077
      %v2079 = vadd.f32 %v2033, %v2034
      %2080 = vadd.xlane.f32.xlu0 %v2079
      %v2081 = vpop.xlane.xlu0 %2080
      %v2082 = vadd.f32 %v2035, %v2036
      %2083 = vadd.xlane.f32.xlu0 %v2082
      %v2084 = vpop.xlane.xlu0 %2083
      %v2085 = vadd.f32 %v1971, 1e-05
      %v2086 = vadd.f32 %v1972, 1e-05
      %v2087 = vadd.f32 %v1973, 1e-05
      %v2088 = vadd.f32 %v1974, 1e-05
      %v2089 = vadd.f32 %v1975, 1e-05
      %v2090 = vadd.f32 %v1976, 1e-05
      %v2091 = vadd.f32 %v1977, 1e-05
      %v2092 = vadd.f32 %v1978, 1e-05
      %v2093 = vadd.f32 %v1979, 1e-05
      %v2094 = vadd.f32 %v1980, 1e-05
      %v2095 = vadd.f32 %v1981, 1e-05
      %v2096 = vadd.f32 %v1982, 1e-05
      %v2097 = vadd.f32 %v1983, 1e-05
      %v2098 = vadd.f32 %v1984, 1e-05
      %v2099 = vadd.f32 %v1985, 1e-05
      %v2100 = vadd.f32 %v1986, 1e-05
      %v2101 = vrsqrt.pop %v2085
      %v2102 = vrsqrt.pop %v2086
      %v2103 = vrsqrt.pop %v2087
      %v2104 = vrsqrt.pop %v2088
      %v2105 = vrsqrt.pop %v2089
      %v2106 = vrsqrt.pop %v2090
      %v2107 = vrsqrt.pop %v2091
      %v2108 = vrsqrt.pop %v2092
      %v2109 = vrsqrt.pop %v2093
      %v2110 = vrsqrt.pop %v2094
      %v2111 = vrsqrt.pop %v2095
      %v2112 = vrsqrt.pop %v2096
      %v2113 = vrsqrt.pop %v2097
      %v2114 = vrsqrt.pop %v2098
      %v2115 = vrsqrt.pop %v2099
      %v2116 = vrsqrt.pop %v2100
      %v2117 = vmul.f32 %v2101, %v2039
      %v2118 = vmul.f32 %v2102, %v2042
      %v2119 = vmul.f32 %v2103, %v2045
      %v2120 = vmul.f32 %v2104, %v2048
      %v2121 = vmul.f32 %v2105, %v2051
      %v2122 = vmul.f32 %v2106, %v2054
      %v2123 = vmul.f32 %v2107, %v2057
      %v2124 = vmul.f32 %v2108, %v2060
      %v2125 = vmul.f32 %v2109, %v2063
      %v2126 = vmul.f32 %v2110, %v2066
      %v2127 = vmul.f32 %v2111, %v2069
      %v2128 = vmul.f32 %v2112, %v2072
      %v2129 = vmul.f32 %v2113, %v2075
      %v2130 = vmul.f32 %v2114, %v2078
      %v2131 = vmul.f32 %v2115, %v2081
      %v2132 = vmul.f32 %v2116, %v2084
      %v2133 = vlaneseq
      %v2134 = vshrl.u32 %v2133, 7
      %v2135 = vsub.s32 3, %v2134
      %v2136 = vrot.slane %v493, %v2135
      %v2137 = vadd.f32 %v2117, %v2136
      %v2138 = vadd.f32 %v2118, %v2136
      %v2139 = vadd.f32 %v2119, %v2136
      %v2140 = vadd.f32 %v2120, %v2136
      %v2141 = vadd.f32 %v2121, %v2136
      %v2142 = vadd.f32 %v2122, %v2136
      %v2143 = vadd.f32 %v2123, %v2136
      %v2144 = vadd.f32 %v2124, %v2136
      %v2145 = vadd.f32 %v2125, %v2136
      %v2146 = vadd.f32 %v2126, %v2136
      %v2147 = vadd.f32 %v2127, %v2136
      %v2148 = vadd.f32 %v2128, %v2136
      %v2149 = vadd.f32 %v2129, %v2136
      %v2150 = vadd.f32 %v2130, %v2136
      %v2151 = vadd.f32 %v2131, %v2136
      %v2152 = vadd.f32 %v2132, %v2136
      %v2153 = vsub.f32 0.0, %v2137
      %v2154 = vsub.f32 0.0, %v2138
      %v2155 = vsub.f32 0.0, %v2139
      %v2156 = vsub.f32 0.0, %v2140
      %v2157 = vsub.f32 0.0, %v2141
      %v2158 = vsub.f32 0.0, %v2142
      %v2159 = vsub.f32 0.0, %v2143
      %v2160 = vsub.f32 0.0, %v2144
      %v2161 = vsub.f32 0.0, %v2145
      %v2162 = vsub.f32 0.0, %v2146
      %v2163 = vsub.f32 0.0, %v2147
      %v2164 = vsub.f32 0.0, %v2148
      %v2165 = vsub.f32 0.0, %v2149
      %v2166 = vsub.f32 0.0, %v2150
      %v2167 = vsub.f32 0.0, %v2151
      %v2168 = vsub.f32 0.0, %v2152
      %v2169 = vmul.f32 %v2153, 1.442695
      %v2170 = vpow.pop %v2169
      %v2171 = vmul.f32 %v2154, 1.442695
      %v2172 = vpow.pop %v2171
      %v2173 = vmul.f32 %v2155, 1.442695
      %v2174 = vpow.pop %v2173
      %v2175 = vmul.f32 %v2156, 1.442695
      %v2176 = vpow.pop %v2175
      %v2177 = vmul.f32 %v2157, 1.442695
      %v2178 = vpow.pop %v2177
      %v2179 = vmul.f32 %v2158, 1.442695
      %v2180 = vpow.pop %v2179
      %v2181 = vmul.f32 %v2159, 1.442695
      %v2182 = vpow.pop %v2181
      %v2183 = vmul.f32 %v2160, 1.442695
      %v2184 = vpow.pop %v2183
      %v2185 = vmul.f32 %v2161, 1.442695
      %v2186 = vpow.pop %v2185
      %v2187 = vmul.f32 %v2162, 1.442695
      %v2188 = vpow.pop %v2187
      %v2189 = vmul.f32 %v2163, 1.442695
      %v2190 = vpow.pop %v2189
      %v2191 = vmul.f32 %v2164, 1.442695
      %v2192 = vpow.pop %v2191
      %v2193 = vmul.f32 %v2165, 1.442695
      %v2194 = vpow.pop %v2193
      %v2195 = vmul.f32 %v2166, 1.442695
      %v2196 = vpow.pop %v2195
      %v2197 = vmul.f32 %v2167, 1.442695
      %v2198 = vpow.pop %v2197
      %v2199 = vmul.f32 %v2168, 1.442695
      %v2200 = vpow.pop %v2199
      %v2201 = vadd.f32 %v2170, 1.0
      %v2202 = vadd.f32 %v2172, 1.0
      %v2203 = vadd.f32 %v2174, 1.0
      %v2204 = vadd.f32 %v2176, 1.0
      %v2205 = vadd.f32 %v2178, 1.0
      %v2206 = vadd.f32 %v2180, 1.0
      %v2207 = vadd.f32 %v2182, 1.0
      %v2208 = vadd.f32 %v2184, 1.0
      %v2209 = vadd.f32 %v2186, 1.0
      %v2210 = vadd.f32 %v2188, 1.0
      %v2211 = vadd.f32 %v2190, 1.0
      %v2212 = vadd.f32 %v2192, 1.0
      %v2213 = vadd.f32 %v2194, 1.0
      %v2214 = vadd.f32 %v2196, 1.0
      %v2215 = vadd.f32 %v2198, 1.0
      %v2216 = vadd.f32 %v2200, 1.0
      %v2217 = vrcp.pop %v2201
      %v2218 = vrcp.pop %v2202
      %v2219 = vrcp.pop %v2203
      %v2220 = vrcp.pop %v2204
      %v2221 = vrcp.pop %v2205
      %v2222 = vrcp.pop %v2206
      %v2223 = vrcp.pop %v2207
      %v2224 = vrcp.pop %v2208
      %v2225 = vrcp.pop %v2209
      %v2226 = vrcp.pop %v2210
      %v2227 = vrcp.pop %v2211
      %v2228 = vrcp.pop %v2212
      %v2229 = vrcp.pop %v2213
      %v2230 = vrcp.pop %v2214
      %v2231 = vrcp.pop %v2215
      %v2232 = vrcp.pop %v2216
      %vm2233 = vcmask 7168
      %2234 = vst.msk [vmem:[%s224] sm:$0xff] %vm2233, %v2217
      %2235 = vst.msk [vmem:[%s224 + $0x8] sm:$0xff] %vm2233, %v2218
      %2236 = vst.msk [vmem:[%s224 + $0x10] sm:$0xff] %vm2233, %v2219
      %2237 = vst.msk [vmem:[%s224 + $0x18] sm:$0xff] %vm2233, %v2220
      %2238 = vst.msk [vmem:[%s224 + $0x20] sm:$0xff] %vm2233, %v2221
      %2239 = vst.msk [vmem:[%s224 + $0x28] sm:$0xff] %vm2233, %v2222
      %2240 = vst.msk [vmem:[%s224 + $0x30] sm:$0xff] %vm2233, %v2223
      %2241 = vst.msk [vmem:[%s224 + $0x38] sm:$0xff] %vm2233, %v2224
      %2242 = vst.msk [vmem:[%s224 + $0x40] sm:$0xff] %vm2233, %v2225
      %2243 = vst.msk [vmem:[%s224 + $0x48] sm:$0xff] %vm2233, %v2226
      %2244 = vst.msk [vmem:[%s224 + $0x50] sm:$0xff] %vm2233, %v2227
      %2245 = vst.msk [vmem:[%s224 + $0x58] sm:$0xff] %vm2233, %v2228
      %2246 = vst.msk [vmem:[%s224 + $0x60] sm:$0xff] %vm2233, %v2229
      %2247 = vst.msk [vmem:[%s224 + $0x68] sm:$0xff] %vm2233, %v2230
      %2248 = vst.msk [vmem:[%s224 + $0x70] sm:$0xff] %vm2233, %v2231
      %2249 = vst.msk [vmem:[%s224 + $0x78] sm:$0xff] %vm2233, %v2232
      %s2250 = smul.u32 16, %s15
      %p2251 = scmp.lt.s32.totalorder %s2250, 31
      %s2252 = scalar_select %p2251, %s2250, 31
      %s2253 = smul.addr %s2252, 8
      %s2254 = scalar_lea.vmem %s4, %s2253
      // Predicated region
      $region37: #{discriminator_forward_batched.1} parent=35 // pred_check
        %p2255 = pneg %p127
      $region38: #{discriminator_forward_batched.1} parent=35 // pred_check_branch
        %2257 = sbr.rel (%p2255) target = $region40
      $region39: #{discriminator_forward_batched.1} parent=35 // pred_region
        %s2258 = smul.u32 16, %s15
      $region40: #{discriminator_forward_batched.1} parent=35 // pred_fallthru
        _
    $region36: #{discriminator_forward_batched.1} parent=5 // pred_fallthru
      _
    %p2259 = scmp.le.s32.totalorder 2, %s10
    // Predicated region
    $region41: #{discriminator_forward_batched.1} parent=5 // pred_check
      %p2260 = pneg %p2259
    $region42: #{discriminator_forward_batched.1} parent=5 // pred_check_branch
      %2262 = sbr.rel (%p2260) target = $region44
    $region43: #{discriminator_forward_batched.1} parent=5 // pred_region
      %s2263 = ssub.s32 %s10, 2
      // Predicated region
      $region45: #{discriminator_forward_batched.1} parent=43 // pred_check
        %p2264 = pneg %p133
      $region46: #{discriminator_forward_batched.1} parent=43 // pred_check_branch
        %2266 = sbr.rel (%p2264) target = $region48
      $region47: #{discriminator_forward_batched.1} parent=43 // pred_region
        %s2267 = smul.u32 16, %s16
        %p2268 = scmp.lt.s32.totalorder %s2267, 31
        %s2269 = scalar_select %p2268, %s2267, 31
        %s2270 = smul.addr %s2269, 8
        %s2271 = scalar_lea.vmem %s4, %s2270
      $region48: #{discriminator_forward_batched.1} parent=43 // pred_fallthru
        _
    $region44: #{discriminator_forward_batched.1} parent=5 // pred_fallthru
      _
  $region6: #{discriminator_forward_batched.1} parent=0 // loop_footer
    %s14 = sadd.s32 1, %s10
  $region7: #{discriminator_forward_batched.1} parent=0 // loop_footer_branch
    %9 = sbr.rel target = $region3
  $region8: #{discriminator_forward_batched.1} parent=0 // loop_exit
    _

</llo_original>
